<compile_context>
chip_gen: v6e
topology: v6e:2x2x1
jax: 0.10.0
libtpu: 0.0.40
codegen_flags: <defaults>
</compile_context>

<pallas_src>
import math
import functools

import jax
import jax.numpy as jnp
from jax.experimental import pallas as pl
from jax.experimental.pallas import tpu as pltpu


def _deformer_kernel(x_ref, wq_ref, wck_ref, bc_ref, wo_ref, bo_ref, out_ref,
                     *, bb, n, d, h, dh, mm_dtype):
    """One grid step: bb batch elements, sequence pre-permuted to [even | odd] halves."""
    kk = n // 2
    rows = bb * n

    x2 = x_ref[...].reshape(rows, d)                       # (bb*n, d), permuted row order

    # ---- to_q: one (bb*n, d) @ (d, d) MXU matmul ----
    q = jnp.dot(x2, wq_ref[...], preferred_element_type=jnp.float32)       # (rows, h*dh)

    # ---- de_filter taps with to_k folded in: p_r[t] = (x[t] @ wk) @ wc[r] ----
    p0 = jnp.dot(x2, wck_ref[0], preferred_element_type=jnp.float32).reshape(bb, n, d)
    p1 = jnp.dot(x2, wck_ref[1], preferred_element_type=jnp.float32).reshape(bb, n, d)
    p2 = jnp.dot(x2, wck_ref[2], preferred_element_type=jnp.float32).reshape(bb, n, d)

    # Permuted layout per batch element: rows [0, kk) are even seq positions 2i,
    # rows [kk, n) are odd seq positions 2i+1.  Conv1d(k=3, pad=1) evaluated at
    # both members of each pooling pair via static sublane slices; seq edges are
    # zero-masked with an in-kernel iota (keys[-1] = keys[n] = 0 padding).
    bc = bc_ref[...]                                       # (1, d)
    row = jax.lax.broadcasted_iota(jnp.int32, (bb, kk, 1), 1)
    tap_prev = jnp.where(row > 0, p0[:, kk - 1:n - 1, :], 0.0)    # keys[2i-1] @ wc0
    tap_next = jnp.where(row < kk - 1, p2[:, 1:kk + 1, :], 0.0)   # keys[2i+2] @ wc2
    conv_e = jnp.maximum(tap_prev + p1[:, :kk, :] + p2[:, kk:, :] + bc, 0.0)
    conv_o = jnp.maximum(p0[:, :kk, :] + p1[:, kk:, :] + tap_next + bc, 0.0)
    pooled = jnp.maximum(conv_e, conv_o)                   # (bb, kk, d): ReLU + max_pool1d(2)

    # ---- per-head attention (values == keys), folded through to_out ----
    q3 = q.reshape(bb, n, d)
    scale = 1.0 / math.sqrt(dh)
    acc = jnp.zeros((rows, d), jnp.float32)
    for hh in range(h):
        qh = q3[:, :, hh * dh:(hh + 1) * dh].astype(mm_dtype)      # (bb, n, dh)
        kh = pooled[:, :, hh * dh:(hh + 1) * dh].astype(mm_dtype)  # (bb, kk, dh)
        dots = jnp.einsum('bqd,bkd->bqk', qh, kh,
                          preferred_element_type=jnp.float32) * scale
        dots = dots - jnp.max(dots, axis=-1, keepdims=True)
        e = jnp.exp(dots)
        attn = e * pl.reciprocal(jnp.sum(e, axis=-1, keepdims=True),
                                 approx=True)                       # dropout p=0 -> id
        out_h = jnp.einsum('bqk,bkd->bqd', attn.astype(mm_dtype), kh,
                           preferred_element_type=jnp.float32)      # (bb, n, dh)
        # Fold the head directly through its slice of Wout -> no head/batch concat.
        acc = acc + jnp.dot(out_h.reshape(rows, dh).astype(wo_ref.dtype),
                            wo_ref[pl.ds(hh * dh, dh), :],
                            preferred_element_type=jnp.float32)

    res = acc + bo_ref[...]                                         # (rows, d)
    out_ref[...] = res.reshape(bb, n, d).astype(out_ref.dtype)


def deformer_self_attention(x, wq, wk, wc, bc, wo, bo, *, heads,
                            num_blocks=1, use_bf16=False):
    """DeFormerSelfAttention forward (context=None, share_kv=True, dropout=0).

    num_blocks: grid steps over the batch (1 for v5e/v6e single-TC; 2 for v7x).
    use_bf16:   cast MXU operands to bf16 (f32 accumulation) on v6e/v7x.
    """
    b, n, d = x.shape
    assert d % heads == 0 and n % 2 == 0
    dh = d // heads
    kk = n // 2
    assert b % num_blocks == 0, "num_blocks must divide the batch"
    bb = b // num_blocks

    # Fold the bias-free key projection into the conv taps: wck[r] = wk @ wc[r].
    wck = jnp.stack([wk @ wc[r] for r in range(3)], axis=0)          # (3, d, d)

    # Even/odd permutation of the sequence (wrapper-side, plain XLA): rows
    # [0, kk) of each batch element are seq positions 0,2,4,... and rows
    # [kk, n) are 1,3,5,...  This turns max_pool1d(2) selection into contiguous
    # slices inside the kernel (no O(n^2) selector matmul, no strided access).
    x_perm = jnp.concatenate([x[:, 0::2, :], x[:, 1::2, :]], axis=1)  # (b, n, d)

    mm_dtype = jnp.bfloat16 if use_bf16 else jnp.float32
    x_perm = x_perm.astype(mm_dtype)
    wq_c = wq.astype(mm_dtype)
    wck_c = wck.astype(mm_dtype)
    wo_c = wo.astype(mm_dtype)

    kernel = functools.partial(_deformer_kernel, bb=bb, n=n, d=d, h=heads, dh=dh,
                               mm_dtype=mm_dtype)
    out_perm = pl.pallas_call(
        kernel,
        out_shape=jax.ShapeDtypeStruct((b, n, d), jnp.float32),
        grid_spec=pltpu.PrefetchScalarGridSpec(
            num_scalar_prefetch=0,
            grid=(num_blocks,),
            in_specs=[
                pl.BlockSpec((bb, n, d), lambda i: (i, 0, 0)),        # x (permuted)
                pl.BlockSpec((d, heads * dh), lambda i: (0, 0)),      # Wq
                pl.BlockSpec((3, d, d), lambda i: (0, 0, 0)),         # folded conv taps
                pl.BlockSpec((1, d), lambda i: (0, 0)),               # conv bias
                pl.BlockSpec((heads * dh, d), lambda i: (0, 0)),      # Wout
                pl.BlockSpec((1, d), lambda i: (0, 0)),               # out bias
            ],
            out_specs=pl.BlockSpec((bb, n, d), lambda i: (i, 0, 0)),
        ),
        compiler_params=pltpu.CompilerParams(
            dimension_semantics=("arbitrary",) if num_blocks == 1 else ("parallel",)),
    )(x_perm, wq_c, wck_c, bc, wo_c, bo)

    # Undo the even/odd permutation (wrapper-side layout plumbing).
    out = out_perm.reshape(b, 2, kk, d).transpose(0, 2, 1, 3).reshape(b, n, d)
    return out


def deformer_ref(x, wq, wk, wc, bc, wo, bo, *, heads):
    """Pure-JAX reference matching the PyTorch forward (unfused weights)."""
    b, n, d = x.shape
    dh = d // heads
    q = x @ wq
    keys = x @ wk                                                     # values == keys
    pad = jnp.pad(keys, ((0, 0), (1, 1), (0, 0)))
    conv = pad[:, 0:n] @ wc[0] + pad[:, 1:n + 1] @ wc[1] + pad[:, 2:n + 2] @ wc[2] + bc
    conv = jnp.maximum(conv, 0.0)
    pooled = jnp.max(conv.reshape(b, n // 2, 2, d), axis=2)           # (b, k, d)
    kk = n // 2
    qh = q.reshape(b, n, heads, dh).transpose(0, 2, 1, 3)
    kh = pooled.reshape(b, kk, heads, dh).transpose(0, 2, 1, 3)
    dots = jnp.einsum('bhnd,bhkd->bhnk', qh, kh) / math.sqrt(dh)
    attn = jax.nn.softmax(dots, axis=-1)
    out = jnp.einsum('bhnk,bhkd->bhnd', attn, kh)
    out = out.transpose(0, 2, 1, 3).reshape(b, n, heads * dh)
    return out @ wo + bo


if __name__ == "__main__":
    b, n, d, heads = 2, 16, 32, 4          # seq_len=16, k=8, dim=32, dim_head=8
    dh = d // heads

    key = jax.random.PRNGKey(0)
    ks = jax.random.split(key, 7)
    x = jax.random.normal(ks[0], (b, n, d), jnp.float32)
    wq = jax.random.normal(ks[1], (d, heads * dh), jnp.float32) * 0.1   # to_q.weight.T
    wk = jax.random.normal(ks[2], (d, d), jnp.float32) * 0.1            # to_k.weight.T
    wc = jax.random.normal(ks[3], (3, d, d), jnp.float32) * 0.1         # de_filter W[:,:,r].T
    bc = jax.random.normal(ks[4], (1, d), jnp.float32) * 0.1            # de_filter bias
    wo = jax.random.normal(ks[5], (heads * dh, d), jnp.float32) * 0.1   # to_out.weight.T
    bo = jax.random.normal(ks[6], (1, d), jnp.float32) * 0.1            # to_out.bias

    out = deformer_self_attention(x, wq, wk, wc, bc, wo, bo, heads=heads)
    out = jax.block_until_ready(out)

    ref = deformer_ref(x, wq, wk, wc, bc, wo, bo, heads=heads)
    assert out.shape == (b, n, d)
    assert jnp.allclose(out, ref, atol=5e-3, rtol=5e-3), \
        f"max abs diff {jnp.max(jnp.abs(out - ref))}"
    print("KERNEL_OK")
</pallas_src>

<mosaic_0001>
module attributes {stable_mosaic.version = 11 : i64} {
  func.func @_deformer_kernel(%arg0: i32, %arg1: memref<2x16x32xf32, #tpu.memory_space<vmem>>, %arg2: memref<32x32xf32, #tpu.memory_space<vmem>>, %arg3: memref<3x32x32xf32, #tpu.memory_space<vmem>>, %arg4: memref<1x32xf32, #tpu.memory_space<vmem>>, %arg5: memref<32x32xf32, #tpu.memory_space<vmem>>, %arg6: memref<1x32xf32, #tpu.memory_space<vmem>>, %arg7: memref<2x16x32xf32, #tpu.memory_space<vmem>>) attributes {dimension_semantics = [#tpu.dimension_semantics<arbitrary>], iteration_bounds = array<i64: 1>, scalar_prefetch = 0 : i64, scratch_operands = 0 : i64, tpu.core_type = #tpu.core_type<tc>, window_params = [{transform_indices = @transform_0, window_bounds = array<i64: 2, 16, 32>}, {pipeline_mode = #tpu.pipeline_mode<synchronous>, transform_indices = @transform_1, window_bounds = array<i64: 32, 32>}, {pipeline_mode = #tpu.pipeline_mode<synchronous>, transform_indices = @transform_2, window_bounds = array<i64: 3, 32, 32>}, {pipeline_mode = #tpu.pipeline_mode<synchronous>, transform_indices = @transform_3, window_bounds = array<i64: 1, 32>}, {pipeline_mode = #tpu.pipeline_mode<synchronous>, transform_indices = @transform_4, window_bounds = array<i64: 32, 32>}, {pipeline_mode = #tpu.pipeline_mode<synchronous>, transform_indices = @transform_5, window_bounds = array<i64: 1, 32>}, {transform_indices = @transform_6, window_bounds = array<i64: 2, 16, 32>}]} {
    %c0 = arith.constant 0 : index
    %c0_0 = arith.constant 0 : index
    %c0_1 = arith.constant 0 : index
    %0 = vector.load %arg1[%c0, %c0_0, %c0_1] : memref<2x16x32xf32, #tpu.memory_space<vmem>>, vector<2x16x32xf32>
    %1 = vector.shape_cast %0 : vector<2x16x32xf32> to vector<32x32xf32>
    %c0_2 = arith.constant 0 : index
    %c0_3 = arith.constant 0 : index
    %2 = vector.load %arg2[%c0_2, %c0_3] : memref<32x32xf32, #tpu.memory_space<vmem>>, vector<32x32xf32>
    %cst = arith.constant dense<0.000000e+00> : vector<32x32xf32>
    %3 = tpu.matmul %1, %2, %cst {dimension_numbers = #tpu.dot_dimension_numbers<[1], [0], [0], [1], [0, 0, 1, 1], [], []>} : vector<32x32xf32>, vector<32x32xf32>, vector<32x32xf32> -> vector<32x32xf32>
    %c0_4 = arith.constant 0 : index
    %c0_5 = arith.constant 0 : index
    %c0_6 = arith.constant 0 : index
    %4 = vector.load %arg3[%c0_4, %c0_5, %c0_6] : memref<3x32x32xf32, #tpu.memory_space<vmem>>, vector<1x32x32xf32>
    %5 = vector.shape_cast %4 : vector<1x32x32xf32> to vector<32x32xf32>
    %cst_7 = arith.constant dense<0.000000e+00> : vector<32x32xf32>
    %6 = tpu.matmul %1, %5, %cst_7 {dimension_numbers = #tpu.dot_dimension_numbers<[1], [0], [0], [1], [0, 0, 1, 1], [], []>} : vector<32x32xf32>, vector<32x32xf32>, vector<32x32xf32> -> vector<32x32xf32>
    %7 = vector.shape_cast %6 : vector<32x32xf32> to vector<2x16x32xf32>
    %c1 = arith.constant 1 : index
    %c0_8 = arith.constant 0 : index
    %c0_9 = arith.constant 0 : index
    %8 = vector.load %arg3[%c1, %c0_8, %c0_9] : memref<3x32x32xf32, #tpu.memory_space<vmem>>, vector<1x32x32xf32>
    %9 = vector.shape_cast %8 : vector<1x32x32xf32> to vector<32x32xf32>
    %cst_10 = arith.constant dense<0.000000e+00> : vector<32x32xf32>
    %10 = tpu.matmul %1, %9, %cst_10 {dimension_numbers = #tpu.dot_dimension_numbers<[1], [0], [0], [1], [0, 0, 1, 1], [], []>} : vector<32x32xf32>, vector<32x32xf32>, vector<32x32xf32> -> vector<32x32xf32>
    %11 = vector.shape_cast %10 : vector<32x32xf32> to vector<2x16x32xf32>
    %c2 = arith.constant 2 : index
    %c0_11 = arith.constant 0 : index
    %c0_12 = arith.constant 0 : index
    %12 = vector.load %arg3[%c2, %c0_11, %c0_12] : memref<3x32x32xf32, #tpu.memory_space<vmem>>, vector<1x32x32xf32>
    %13 = vector.shape_cast %12 : vector<1x32x32xf32> to vector<32x32xf32>
    %cst_13 = arith.constant dense<0.000000e+00> : vector<32x32xf32>
    %14 = tpu.matmul %1, %13, %cst_13 {dimension_numbers = #tpu.dot_dimension_numbers<[1], [0], [0], [1], [0, 0, 1, 1], [], []>} : vector<32x32xf32>, vector<32x32xf32>, vector<32x32xf32> -> vector<32x32xf32>
    %15 = vector.shape_cast %14 : vector<32x32xf32> to vector<2x16x32xf32>
    %c0_14 = arith.constant 0 : index
    %c0_15 = arith.constant 0 : index
    %16 = vector.load %arg4[%c0_14, %c0_15] : memref<1x32xf32, #tpu.memory_space<vmem>>, vector<1x32xf32>
    %17 = tpu.iota {dimensions = array<i32: 1>} : vector<2x8x1xi32>
    %c0_i32 = arith.constant 0 : i32
    %18 = vector.broadcast %c0_i32 : i32 to vector<2x8x1xi32>
    %19 = arith.cmpi sgt, %17, %18 : vector<2x8x1xi32>
    %20 = vector.extract_strided_slice %7 {offsets = [0, 7, 0], sizes = [2, 8, 32], strides = [1, 1, 1]} : vector<2x16x32xf32> to vector<2x8x32xf32>
    %cst_16 = arith.constant 0.000000e+00 : f32
    %21 = vector.shape_cast %19 : vector<2x8x1xi1> to vector<2x8x1xi1>
    %22 = vector.broadcast %21 : vector<2x8x1xi1> to vector<2x8x32xi1>
    %23 = vector.broadcast %cst_16 : f32 to vector<2x8x32xf32>
    %24 = arith.select %22, %20, %23 : vector<2x8x32xi1>, vector<2x8x32xf32>
    %c7_i32 = arith.constant 7 : i32
    %25 = vector.broadcast %c7_i32 : i32 to vector<2x8x1xi32>
    %26 = arith.cmpi slt, %17, %25 : vector<2x8x1xi32>
    %27 = vector.extract_strided_slice %15 {offsets = [0, 1, 0], sizes = [2, 8, 32], strides = [1, 1, 1]} : vector<2x16x32xf32> to vector<2x8x32xf32>
    %cst_17 = arith.constant 0.000000e+00 : f32
    %28 = vector.shape_cast %26 : vector<2x8x1xi1> to vector<2x8x1xi1>
    %29 = vector.broadcast %28 : vector<2x8x1xi1> to vector<2x8x32xi1>
    %30 = vector.broadcast %cst_17 : f32 to vector<2x8x32xf32>
    %31 = arith.select %29, %27, %30 : vector<2x8x32xi1>, vector<2x8x32xf32>
    %32 = vector.extract_strided_slice %11 {offsets = [0, 0, 0], sizes = [2, 8, 32], strides = [1, 1, 1]} : vector<2x16x32xf32> to vector<2x8x32xf32>
    %33 = arith.addf %24, %32 : vector<2x8x32xf32>
    %34 = vector.extract_strided_slice %15 {offsets = [0, 8, 0], sizes = [2, 8, 32], strides = [1, 1, 1]} : vector<2x16x32xf32> to vector<2x8x32xf32>
    %35 = arith.addf %33, %34 : vector<2x8x32xf32>
    %36 = vector.shape_cast %16 : vector<1x32xf32> to vector<1x1x32xf32>
    %37 = vector.broadcast %36 : vector<1x1x32xf32> to vector<2x8x32xf32>
    %38 = arith.addf %35, %37 : vector<2x8x32xf32>
    %cst_18 = arith.constant 0.000000e+00 : f32
    %39 = vector.broadcast %cst_18 : f32 to vector<2x8x32xf32>
    %40 = arith.maximumf %38, %39 : vector<2x8x32xf32>
    %41 = vector.extract_strided_slice %7 {offsets = [0, 0, 0], sizes = [2, 8, 32], strides = [1, 1, 1]} : vector<2x16x32xf32> to vector<2x8x32xf32>
    %42 = vector.extract_strided_slice %11 {offsets = [0, 8, 0], sizes = [2, 8, 32], strides = [1, 1, 1]} : vector<2x16x32xf32> to vector<2x8x32xf32>
    %43 = arith.addf %41, %42 : vector<2x8x32xf32>
    %44 = arith.addf %43, %31 : vector<2x8x32xf32>
    %45 = vector.shape_cast %16 : vector<1x32xf32> to vector<1x1x32xf32>
    %46 = vector.broadcast %45 : vector<1x1x32xf32> to vector<2x8x32xf32>
    %47 = arith.addf %44, %46 : vector<2x8x32xf32>
    %cst_19 = arith.constant 0.000000e+00 : f32
    %48 = vector.broadcast %cst_19 : f32 to vector<2x8x32xf32>
    %49 = arith.maximumf %47, %48 : vector<2x8x32xf32>
    %50 = arith.maximumf %40, %49 : vector<2x8x32xf32>
    %51 = vector.shape_cast %3 : vector<32x32xf32> to vector<2x16x32xf32>
    %cst_20 = arith.constant 0.000000e+00 : f32
    %52 = vector.broadcast %cst_20 : f32 to vector<32x32xf32>
    %53 = vector.extract_strided_slice %51 {offsets = [0, 0, 0], sizes = [2, 16, 8], strides = [1, 1, 1]} : vector<2x16x32xf32> to vector<2x16x8xf32>
    %54 = vector.extract_strided_slice %50 {offsets = [0, 0, 0], sizes = [2, 8, 8], strides = [1, 1, 1]} : vector<2x8x32xf32> to vector<2x8x8xf32>
    "tpu.trace_start"() <{level = 10 : i32, message = "bqd,bkd->bqk"}> : () -> ()
    %cst_21 = arith.constant dense<0.000000e+00> : vector<2x16x8xf32>
    %55 = tpu.matmul %53, %54, %cst_21 {dimension_numbers = #tpu.dot_dimension_numbers<[2], [2], [1], [1], [0, 0, 0, 1, 1, 1], [0], [0]>} : vector<2x16x8xf32>, vector<2x8x8xf32>, vector<2x16x8xf32> -> vector<2x16x8xf32>
    "tpu.trace_stop"() : () -> ()
    %cst_22 = arith.constant 0.353553385 : f32
    %56 = vector.broadcast %cst_22 : f32 to vector<2x16x8xf32>
    %57 = arith.mulf %55, %56 : vector<2x16x8xf32>
    %cst_23 = arith.constant dense<0xFF800000> : vector<2x16xf32>
    %58 = vector.multi_reduction <maximumf>, %57, %cst_23 [2] : vector<2x16x8xf32> to vector<2x16xf32>
    %59 = vector.shape_cast %58 : vector<2x16xf32> to vector<2x16x1xf32>
    %60 = vector.broadcast %59 : vector<2x16x1xf32> to vector<2x16x8xf32>
    %61 = arith.subf %57, %60 : vector<2x16x8xf32>
    %62 = math.exp %61 : vector<2x16x8xf32>
    %cst_24 = arith.constant dense<0.000000e+00> : vector<2x16xf32>
    %63 = vector.multi_reduction <add>, %62, %cst_24 [2] : vector<2x16x8xf32> to vector<2x16xf32>
    %64 = vector.shape_cast %63 : vector<2x16xf32> to vector<2x16x1xf32>
    %65 = tpu.reciprocal %64 {approx = true} : vector<2x16x1xf32> -> vector<2x16x1xf32>
    %66 = vector.broadcast %65 : vector<2x16x1xf32> to vector<2x16x8xf32>
    %67 = arith.mulf %62, %66 : vector<2x16x8xf32>
    "tpu.trace_start"() <{level = 10 : i32, message = "bqk,bkd->bqd"}> : () -> ()
    %cst_25 = arith.constant dense<0.000000e+00> : vector<2x16x8xf32>
    %68 = tpu.matmul %67, %54, %cst_25 {dimension_numbers = #tpu.dot_dimension_numbers<[2], [1], [1], [2], [0, 0, 0, 1, 1, 2], [0], [0]>} : vector<2x16x8xf32>, vector<2x8x8xf32>, vector<2x16x8xf32> -> vector<2x16x8xf32>
    "tpu.trace_stop"() : () -> ()
    %69 = vector.shape_cast %68 : vector<2x16x8xf32> to vector<32x8xf32>
    %c0_26 = arith.constant 0 : index
    %c0_27 = arith.constant 0 : index
    %70 = vector.load %arg5[%c0_26, %c0_27] : memref<32x32xf32, #tpu.memory_space<vmem>>, vector<8x32xf32>
    %cst_28 = arith.constant dense<0.000000e+00> : vector<32x32xf32>
    %71 = tpu.matmul %69, %70, %cst_28 {dimension_numbers = #tpu.dot_dimension_numbers<[1], [0], [0], [1], [0, 0, 1, 1], [], []>} : vector<32x8xf32>, vector<8x32xf32>, vector<32x32xf32> -> vector<32x32xf32>
    %72 = arith.addf %52, %71 : vector<32x32xf32>
    %73 = vector.extract_strided_slice %51 {offsets = [0, 0, 8], sizes = [2, 16, 8], strides = [1, 1, 1]} : vector<2x16x32xf32> to vector<2x16x8xf32>
    %74 = vector.extract_strided_slice %50 {offsets = [0, 0, 8], sizes = [2, 8, 8], strides = [1, 1, 1]} : vector<2x8x32xf32> to vector<2x8x8xf32>
    "tpu.trace_start"() <{level = 10 : i32, message = "bqd,bkd->bqk"}> : () -> ()
    %cst_29 = arith.constant dense<0.000000e+00> : vector<2x16x8xf32>
    %75 = tpu.matmul %73, %74, %cst_29 {dimension_numbers = #tpu.dot_dimension_numbers<[2], [2], [1], [1], [0, 0, 0, 1, 1, 1], [0], [0]>} : vector<2x16x8xf32>, vector<2x8x8xf32>, vector<2x16x8xf32> -> vector<2x16x8xf32>
    "tpu.trace_stop"() : () -> ()
    %cst_30 = arith.constant 0.353553385 : f32
    %76 = vector.broadcast %cst_30 : f32 to vector<2x16x8xf32>
    %77 = arith.mulf %75, %76 : vector<2x16x8xf32>
    %cst_31 = arith.constant dense<0xFF800000> : vector<2x16xf32>
    %78 = vector.multi_reduction <maximumf>, %77, %cst_31 [2] : vector<2x16x8xf32> to vector<2x16xf32>
    %79 = vector.shape_cast %78 : vector<2x16xf32> to vector<2x16x1xf32>
    %80 = vector.broadcast %79 : vector<2x16x1xf32> to vector<2x16x8xf32>
    %81 = arith.subf %77, %80 : vector<2x16x8xf32>
    %82 = math.exp %81 : vector<2x16x8xf32>
    %cst_32 = arith.constant dense<0.000000e+00> : vector<2x16xf32>
    %83 = vector.multi_reduction <add>, %82, %cst_32 [2] : vector<2x16x8xf32> to vector<2x16xf32>
    %84 = vector.shape_cast %83 : vector<2x16xf32> to vector<2x16x1xf32>
    %85 = tpu.reciprocal %84 {approx = true} : vector<2x16x1xf32> -> vector<2x16x1xf32>
    %86 = vector.broadcast %85 : vector<2x16x1xf32> to vector<2x16x8xf32>
    %87 = arith.mulf %82, %86 : vector<2x16x8xf32>
    "tpu.trace_start"() <{level = 10 : i32, message = "bqk,bkd->bqd"}> : () -> ()
    %cst_33 = arith.constant dense<0.000000e+00> : vector<2x16x8xf32>
    %88 = tpu.matmul %87, %74, %cst_33 {dimension_numbers = #tpu.dot_dimension_numbers<[2], [1], [1], [2], [0, 0, 0, 1, 1, 2], [0], [0]>} : vector<2x16x8xf32>, vector<2x8x8xf32>, vector<2x16x8xf32> -> vector<2x16x8xf32>
    "tpu.trace_stop"() : () -> ()
    %89 = vector.shape_cast %88 : vector<2x16x8xf32> to vector<32x8xf32>
    %c8 = arith.constant 8 : index
    %c0_34 = arith.constant 0 : index
    %90 = vector.load %arg5[%c8, %c0_34] : memref<32x32xf32, #tpu.memory_space<vmem>>, vector<8x32xf32>
    %cst_35 = arith.constant dense<0.000000e+00> : vector<32x32xf32>
    %91 = tpu.matmul %89, %90, %cst_35 {dimension_numbers = #tpu.dot_dimension_numbers<[1], [0], [0], [1], [0, 0, 1, 1], [], []>} : vector<32x8xf32>, vector<8x32xf32>, vector<32x32xf32> -> vector<32x32xf32>
    %92 = arith.addf %72, %91 : vector<32x32xf32>
    %93 = vector.extract_strided_slice %51 {offsets = [0, 0, 16], sizes = [2, 16, 8], strides = [1, 1, 1]} : vector<2x16x32xf32> to vector<2x16x8xf32>
    %94 = vector.extract_strided_slice %50 {offsets = [0, 0, 16], sizes = [2, 8, 8], strides = [1, 1, 1]} : vector<2x8x32xf32> to vector<2x8x8xf32>
    "tpu.trace_start"() <{level = 10 : i32, message = "bqd,bkd->bqk"}> : () -> ()
    %cst_36 = arith.constant dense<0.000000e+00> : vector<2x16x8xf32>
    %95 = tpu.matmul %93, %94, %cst_36 {dimension_numbers = #tpu.dot_dimension_numbers<[2], [2], [1], [1], [0, 0, 0, 1, 1, 1], [0], [0]>} : vector<2x16x8xf32>, vector<2x8x8xf32>, vector<2x16x8xf32> -> vector<2x16x8xf32>
    "tpu.trace_stop"() : () -> ()
    %cst_37 = arith.constant 0.353553385 : f32
    %96 = vector.broadcast %cst_37 : f32 to vector<2x16x8xf32>
    %97 = arith.mulf %95, %96 : vector<2x16x8xf32>
    %cst_38 = arith.constant dense<0xFF800000> : vector<2x16xf32>
    %98 = vector.multi_reduction <maximumf>, %97, %cst_38 [2] : vector<2x16x8xf32> to vector<2x16xf32>
    %99 = vector.shape_cast %98 : vector<2x16xf32> to vector<2x16x1xf32>
    %100 = vector.broadcast %99 : vector<2x16x1xf32> to vector<2x16x8xf32>
    %101 = arith.subf %97, %100 : vector<2x16x8xf32>
    %102 = math.exp %101 : vector<2x16x8xf32>
    %cst_39 = arith.constant dense<0.000000e+00> : vector<2x16xf32>
    %103 = vector.multi_reduction <add>, %102, %cst_39 [2] : vector<2x16x8xf32> to vector<2x16xf32>
    %104 = vector.shape_cast %103 : vector<2x16xf32> to vector<2x16x1xf32>
    %105 = tpu.reciprocal %104 {approx = true} : vector<2x16x1xf32> -> vector<2x16x1xf32>
    %106 = vector.broadcast %105 : vector<2x16x1xf32> to vector<2x16x8xf32>
    %107 = arith.mulf %102, %106 : vector<2x16x8xf32>
    "tpu.trace_start"() <{level = 10 : i32, message = "bqk,bkd->bqd"}> : () -> ()
    %cst_40 = arith.constant dense<0.000000e+00> : vector<2x16x8xf32>
    %108 = tpu.matmul %107, %94, %cst_40 {dimension_numbers = #tpu.dot_dimension_numbers<[2], [1], [1], [2], [0, 0, 0, 1, 1, 2], [0], [0]>} : vector<2x16x8xf32>, vector<2x8x8xf32>, vector<2x16x8xf32> -> vector<2x16x8xf32>
    "tpu.trace_stop"() : () -> ()
    %109 = vector.shape_cast %108 : vector<2x16x8xf32> to vector<32x8xf32>
    %c16 = arith.constant 16 : index
    %c0_41 = arith.constant 0 : index
    %110 = vector.load %arg5[%c16, %c0_41] : memref<32x32xf32, #tpu.memory_space<vmem>>, vector<8x32xf32>
    %cst_42 = arith.constant dense<0.000000e+00> : vector<32x32xf32>
    %111 = tpu.matmul %109, %110, %cst_42 {dimension_numbers = #tpu.dot_dimension_numbers<[1], [0], [0], [1], [0, 0, 1, 1], [], []>} : vector<32x8xf32>, vector<8x32xf32>, vector<32x32xf32> -> vector<32x32xf32>
    %112 = arith.addf %92, %111 : vector<32x32xf32>
    %113 = vector.extract_strided_slice %51 {offsets = [0, 0, 24], sizes = [2, 16, 8], strides = [1, 1, 1]} : vector<2x16x32xf32> to vector<2x16x8xf32>
    %114 = vector.extract_strided_slice %50 {offsets = [0, 0, 24], sizes = [2, 8, 8], strides = [1, 1, 1]} : vector<2x8x32xf32> to vector<2x8x8xf32>
    "tpu.trace_start"() <{level = 10 : i32, message = "bqd,bkd->bqk"}> : () -> ()
    %cst_43 = arith.constant dense<0.000000e+00> : vector<2x16x8xf32>
    %115 = tpu.matmul %113, %114, %cst_43 {dimension_numbers = #tpu.dot_dimension_numbers<[2], [2], [1], [1], [0, 0, 0, 1, 1, 1], [0], [0]>} : vector<2x16x8xf32>, vector<2x8x8xf32>, vector<2x16x8xf32> -> vector<2x16x8xf32>
    "tpu.trace_stop"() : () -> ()
    %cst_44 = arith.constant 0.353553385 : f32
    %116 = vector.broadcast %cst_44 : f32 to vector<2x16x8xf32>
    %117 = arith.mulf %115, %116 : vector<2x16x8xf32>
    %cst_45 = arith.constant dense<0xFF800000> : vector<2x16xf32>
    %118 = vector.multi_reduction <maximumf>, %117, %cst_45 [2] : vector<2x16x8xf32> to vector<2x16xf32>
    %119 = vector.shape_cast %118 : vector<2x16xf32> to vector<2x16x1xf32>
    %120 = vector.broadcast %119 : vector<2x16x1xf32> to vector<2x16x8xf32>
    %121 = arith.subf %117, %120 : vector<2x16x8xf32>
    %122 = math.exp %121 : vector<2x16x8xf32>
    %cst_46 = arith.constant dense<0.000000e+00> : vector<2x16xf32>
    %123 = vector.multi_reduction <add>, %122, %cst_46 [2] : vector<2x16x8xf32> to vector<2x16xf32>
    %124 = vector.shape_cast %123 : vector<2x16xf32> to vector<2x16x1xf32>
    %125 = tpu.reciprocal %124 {approx = true} : vector<2x16x1xf32> -> vector<2x16x1xf32>
    %126 = vector.broadcast %125 : vector<2x16x1xf32> to vector<2x16x8xf32>
    %127 = arith.mulf %122, %126 : vector<2x16x8xf32>
    "tpu.trace_start"() <{level = 10 : i32, message = "bqk,bkd->bqd"}> : () -> ()
    %cst_47 = arith.constant dense<0.000000e+00> : vector<2x16x8xf32>
    %128 = tpu.matmul %127, %114, %cst_47 {dimension_numbers = #tpu.dot_dimension_numbers<[2], [1], [1], [2], [0, 0, 0, 1, 1, 2], [0], [0]>} : vector<2x16x8xf32>, vector<2x8x8xf32>, vector<2x16x8xf32> -> vector<2x16x8xf32>
    "tpu.trace_stop"() : () -> ()
    %129 = vector.shape_cast %128 : vector<2x16x8xf32> to vector<32x8xf32>
    %c24 = arith.constant 24 : index
    %c0_48 = arith.constant 0 : index
    %130 = vector.load %arg5[%c24, %c0_48] : memref<32x32xf32, #tpu.memory_space<vmem>>, vector<8x32xf32>
    %cst_49 = arith.constant dense<0.000000e+00> : vector<32x32xf32>
    %131 = tpu.matmul %129, %130, %cst_49 {dimension_numbers = #tpu.dot_dimension_numbers<[1], [0], [0], [1], [0, 0, 1, 1], [], []>} : vector<32x8xf32>, vector<8x32xf32>, vector<32x32xf32> -> vector<32x32xf32>
    %132 = arith.addf %112, %131 : vector<32x32xf32>
    %c0_50 = arith.constant 0 : index
    %c0_51 = arith.constant 0 : index
    %133 = vector.load %arg6[%c0_50, %c0_51] : memref<1x32xf32, #tpu.memory_space<vmem>>, vector<1x32xf32>
    %134 = vector.broadcast %133 : vector<1x32xf32> to vector<32x32xf32>
    %135 = arith.addf %132, %134 : vector<32x32xf32>
    %136 = vector.shape_cast %135 : vector<32x32xf32> to vector<2x16x32xf32>
    %c0_52 = arith.constant 0 : index
    %c0_53 = arith.constant 0 : index
    %c0_54 = arith.constant 0 : index
    %137 = vector.load %arg7[%c0_52, %c0_53, %c0_54] : memref<2x16x32xf32, #tpu.memory_space<vmem>>, vector<2x16x32xf32>
    tpu.vector_store %arg7[%c0_52, %c0_53, %c0_54], %136 {strides = array<i32>} : memref<2x16x32xf32, #tpu.memory_space<vmem>>, vector<2x16x32xf32>,
    return
  }
  func.func @transform_0(%arg0: i32) -> (i32, i32, i32) {
    %c0_i32 = arith.constant 0 : i32
    %c0_i32_0 = arith.constant 0 : i32
    %c0_i32_1 = arith.constant 0 : i32
    return %arg0, %c0_i32, %c0_i32_0 : i32, i32, i32
  }
  func.func @transform_1(%arg0: i32) -> (i32, i32) {
    %c0_i32 = arith.constant 0 : i32
    %c0_i32_0 = arith.constant 0 : i32
    %c0_i32_1 = arith.constant 0 : i32
    return %c0_i32, %c0_i32_0 : i32, i32
  }
  func.func @transform_2(%arg0: i32) -> (i32, i32, i32) {
    %c0_i32 = arith.constant 0 : i32
    %c0_i32_0 = arith.constant 0 : i32
    %c0_i32_1 = arith.constant 0 : i32
    %c0_i32_2 = arith.constant 0 : i32
    return %c0_i32, %c0_i32_0, %c0_i32_1 : i32, i32, i32
  }
  func.func @transform_3(%arg0: i32) -> (i32, i32) {
    %c0_i32 = arith.constant 0 : i32
    %c0_i32_0 = arith.constant 0 : i32
    %c0_i32_1 = arith.constant 0 : i32
    return %c0_i32, %c0_i32_0 : i32, i32
  }
  func.func @transform_4(%arg0: i32) -> (i32, i32) {
    %c0_i32 = arith.constant 0 : i32
    %c0_i32_0 = arith.constant 0 : i32
    %c0_i32_1 = arith.constant 0 : i32
    return %c0_i32, %c0_i32_0 : i32, i32
  }
  func.func @transform_5(%arg0: i32) -> (i32, i32) {
    %c0_i32 = arith.constant 0 : i32
    %c0_i32_0 = arith.constant 0 : i32
    %c0_i32_1 = arith.constant 0 : i32
    return %c0_i32, %c0_i32_0 : i32, i32
  }
  func.func @transform_6(%arg0: i32) -> (i32, i32, i32) {
    %c0_i32 = arith.constant 0 : i32
    %c0_i32_0 = arith.constant 0 : i32
    %c0_i32_1 = arith.constant 0 : i32
    return %arg0, %c0_i32, %c0_i32_0 : i32, i32, i32
  }
}

</mosaic_0001>

<llo_original>
// kernel: tpu_custom_call.1
$region0: #{tpu_custom_call.1}
  #allocation0 [shape = 'u32[]', space=smem, size = 0x4, offset = 0x4, fixed_abs, tag = 'smem constant byte address 0x4 - core index']
  #allocation1 [shape = 'u32[144,128]{1,0:T(1,128)}', space=vmem, size = 0x12000, scoped, tag = 'internal scratch']
  %s0 = inlined_call_operand.hbm [shape: f32[2,16,32], index: 0, kind: input, shape index: {}]
  %s1 = inlined_call_operand.hbm [shape: f32[32,32], index: 1, kind: input, shape index: {}]
  %s2 = inlined_call_operand.hbm [shape: f32[3,32,32], index: 2, kind: input, shape index: {}]
  %s3 = inlined_call_operand.vmem [shape: f32[1,32], index: 3, kind: input, shape index: {}]
  %s4 = inlined_call_operand.hbm [shape: f32[32,32], index: 4, kind: input, shape index: {}]
  %s5 = inlined_call_operand.vmem [shape: f32[1,32], index: 5, kind: input, shape index: {}]
  %s6 = inlined_call_operand.hbm [shape: f32[2,16,32], index: 6, kind: output, shape index: {}]
  %s7 = sld [smem:[#allocation0]]
  $region50: #{tpu_custom_call.1} parent=0
    _
  %s9 = ssub.s32 1, %s7
  %s10 = scalar_select 0, %s9, %s7
  $region1: #{tpu_custom_call.1} parent=0
    #allocation2 [shape = 'u8[16384]{0}', space=vmem, size = 0x4000, scoped, tag = 'input window, operand 0, single buffered']
    #allocation3 [shape = 's32[1]{0}', space=sflag, size = 0x4, scoped, tag = 'scoped memory for tpu_custom_call.1']
    #allocation4 [shape = 's32[1]{0}', space=sflag, size = 0x4, scoped, tag = 'scoped memory for tpu_custom_call.1']
    #allocation5 [shape = 'u8[16384]{0}', space=vmem, size = 0x4000, scoped, tag = 'input window, operand 1, single buffered']
    #allocation6 [shape = 's32[1]{0}', space=sflag, size = 0x4, scoped, tag = 'scoped memory for tpu_custom_call.1']
    #allocation7 [shape = 'u8[49152]{0}', space=vmem, size = 0xc000, scoped, tag = 'input window, operand 2, single buffered']
    #allocation8 [shape = 'u8[16384]{0}', space=vmem, size = 0x4000, scoped, tag = 'input window, operand 4, single buffered']
    #allocation9 [shape = 's32[1]{0}', space=sflag, size = 0x4, scoped, tag = 'scoped memory for tpu_custom_call.1']
    #allocation10 [shape = 'u8[16384]{0}', space=vmem, size = 0x4000, scoped, tag = 'output window, operand 0, single buffered']
    %11 = vsyncpa [#allocation3], 0
    %12 = vsyncpa [#allocation6], 0
    %13 = vsyncpa [#allocation9], 0
    %14 = vsyncpa [#allocation4], 0
    // Predicated region
    $region2: #{tpu_custom_call.1} parent=1 // pred_check
      _
    $region3: #{tpu_custom_call.1} parent=1 // pred_check_branch
      %16 = sbr.rel (0) target = $region5
    $region4: #{tpu_custom_call.1} parent=1 // pred_region
      %s18 = ssub.s32 512, 512
      %19 = vsyncadd [#allocation3], %s18
      %s20 = sshll.u32 [#allocation2], 4
      %s21 = int_to_ptr.vmem [resolvable:$true] %s20
      %26 = dma.hbm_to_vmem [thread:$0]  %s0, 512, %s21, [#allocation3], 128, 128, 8
    $region5: #{tpu_custom_call.1} parent=1 // pred_fallthru
      _
    // Predicated region
    $region6: #{tpu_custom_call.1} parent=1 // pred_check
      _
    $region7: #{tpu_custom_call.1} parent=1 // pred_check_branch
      %28 = sbr.rel (0) target = $region9
    $region8: #{tpu_custom_call.1} parent=1 // pred_region
      %s30 = ssub.s32 512, 512
      %31 = vsyncadd [#allocation6], %s30
      %s32 = sshll.u32 [#allocation5], 4
      %s33 = int_to_ptr.vmem [resolvable:$true] %s32
      %38 = dma.hbm_to_vmem [thread:$0]  %s1, 512, %s33, [#allocation6], 128, 128, 8
    $region9: #{tpu_custom_call.1} parent=1 // pred_fallthru
      _
    // Predicated region
    $region10: #{tpu_custom_call.1} parent=1 // pred_check
      _
    $region11: #{tpu_custom_call.1} parent=1 // pred_check_branch
      %40 = sbr.rel (0) target = $region13
    $region12: #{tpu_custom_call.1} parent=1 // pred_region
      %s42 = ssub.s32 1536, 1536
      %43 = vsyncadd [#allocation6], %s42
      %s44 = sshll.u32 [#allocation7], 4
      %s45 = int_to_ptr.vmem [resolvable:$true] %s44
      %50 = dma.hbm_to_vmem [thread:$0]  %s2, 1536, %s45, [#allocation6], 128, 128, 8
    $region13: #{tpu_custom_call.1} parent=1 // pred_fallthru
      _
    // Predicated region
    $region14: #{tpu_custom_call.1} parent=1 // pred_check
      _
    $region15: #{tpu_custom_call.1} parent=1 // pred_check_branch
      %52 = sbr.rel (0) target = $region17
    $region16: #{tpu_custom_call.1} parent=1 // pred_region
      _
    $region17: #{tpu_custom_call.1} parent=1 // pred_fallthru
      _
    // Predicated region
    $region18: #{tpu_custom_call.1} parent=1 // pred_check
      _
    $region19: #{tpu_custom_call.1} parent=1 // pred_check_branch
      %54 = sbr.rel (0) target = $region21
    $region20: #{tpu_custom_call.1} parent=1 // pred_region
      %s56 = ssub.s32 512, 512
      %57 = vsyncadd [#allocation9], %s56
      %s58 = sshll.u32 [#allocation8], 4
      %s59 = int_to_ptr.vmem [resolvable:$true] %s58
      %64 = dma.hbm_to_vmem [thread:$0]  %s4, 512, %s59, [#allocation9], 128, 128, 8
    $region21: #{tpu_custom_call.1} parent=1 // pred_fallthru
      _
    // Predicated region
    $region22: #{tpu_custom_call.1} parent=1 // pred_check
      _
    $region23: #{tpu_custom_call.1} parent=1 // pred_check_branch
      %66 = sbr.rel (0) target = $region25
    $region24: #{tpu_custom_call.1} parent=1 // pred_region
      _
    $region25: #{tpu_custom_call.1} parent=1 // pred_fallthru
      _
    // Predicated region
    $region26: #{tpu_custom_call.1} parent=1 // pred_check
      _
    $region27: #{tpu_custom_call.1} parent=1 // pred_check_branch
      %68 = sbr.rel (0) target = $region29
    $region28: #{tpu_custom_call.1} parent=1 // pred_region
      %69 = dma.done [#allocation3], 512
    $region29: #{tpu_custom_call.1} parent=1 // pred_fallthru
      _
    // Predicated region
    $region30: #{tpu_custom_call.1} parent=1 // pred_check
      _
    $region31: #{tpu_custom_call.1} parent=1 // pred_check_branch
      %71 = sbr.rel (0) target = $region33
    $region32: #{tpu_custom_call.1} parent=1 // pred_region
      %72 = dma.done [#allocation6], 512
    $region33: #{tpu_custom_call.1} parent=1 // pred_fallthru
      _
    // Predicated region
    $region34: #{tpu_custom_call.1} parent=1 // pred_check
      _
    $region35: #{tpu_custom_call.1} parent=1 // pred_check_branch
      %74 = sbr.rel (0) target = $region37
    $region36: #{tpu_custom_call.1} parent=1 // pred_region
      %75 = dma.done [#allocation6], 1536
    $region37: #{tpu_custom_call.1} parent=1 // pred_fallthru
      _
    // Predicated region
    $region38: #{tpu_custom_call.1} parent=1 // pred_check
      _
    $region39: #{tpu_custom_call.1} parent=1 // pred_check_branch
      %77 = sbr.rel (0) target = $region41
    $region40: #{tpu_custom_call.1} parent=1 // pred_region
      %78 = dma.done [#allocation9], 512
    $region41: #{tpu_custom_call.1} parent=1 // pred_fallthru
      _
    %v79 = vld [vmem:[#allocation2] sm:$0xff]
    %v80 = vld [vmem:[#allocation2 + $0x8] sm:$0xff]
    %v81 = vld [vmem:[#allocation2 + $0x10] sm:$0xff]
    %v82 = vld [vmem:[#allocation2 + $0x18] sm:$0xff]
    %v83 = vld [vmem:[#allocation5] sm:$0xff]
    %v84 = vld [vmem:[#allocation5 + $0x8] sm:$0xff]
    %v85 = vld [vmem:[#allocation5 + $0x10] sm:$0xff]
    %v86 = vld [vmem:[#allocation5 + $0x18] sm:$0xff]
    %vm87 = vcmask 261120
    %v89 = vsel %vm87, %v79, 0
    %v92 = vsel %vm87, %v80, 0
    %v95 = vsel %vm87, %v81, 0
    %v98 = vsel %vm87, %v82, 0
    %100 = vmatprep.subr.mxu0 0.0
    %101 = vmatpush1.msra.mxu0 0.0
    %102 = vmatprep.subr.mxu0 0.0
    %103 = vmatpush1.msra.mxu0 0.0
    %104 = vmatprep.subr.mxu0 0.0
    %105 = vmatpush1.msra.mxu0 0.0
    %106 = vmatprep.subr.mxu0 0.0
    %107 = vmatpush1.msra.mxu0 0.0
    %108 = vmatprep.subr.mxu0 0.0
    %109 = vmatpush1.msra.mxu0 0.0
    %110 = vmatprep.subr.mxu0 0.0
    %111 = vmatpush1.msra.mxu0 0.0
    %112 = vmatprep.subr.mxu0 0.0
    %113 = vmatpush1.msra.mxu0 0.0
    %114 = vmatprep.subr.mxu0 0.0
    %115 = vmatpush1.msra.mxu0 0.0
    %116 = vmatprep.subr.mxu0 0.0
    %117 = vmatpush1.msra.mxu0 0.0
    %118 = vmatprep.subr.mxu0 0.0
    %119 = vmatpush1.msra.mxu0 0.0
    %120 = vmatprep.subr.mxu0 0.0
    %121 = vmatpush1.msra.mxu0 0.0
    %122 = vmatprep.subr.mxu0 0.0
    %123 = vmatpush1.msra.mxu0 0.0
    %124 = vmatprep.subr.mxu0 0.0
    %125 = vmatpush1.msra.mxu0 %v86
    %126 = vmatprep.subr.mxu0 0.0
    %127 = vmatpush1.msra.mxu0 %v85
    %128 = vmatprep.subr.mxu0 0.0
    %129 = vmatpush1.msra.mxu0 %v84
    %130 = vmatprep.subr.mxu0 0.0
    %131 = vmatpush1.msra.mxu0 %v83
    %132 = vmatprep.subr.mxu0 0.0
    %133 = vmatpush2.msra.mxu0 0.0
    %134 = vmatprep.subr.mxu0 0.0
    %135 = vmatpush2.msra.mxu0 0.0
    %136 = vmatprep.subr.mxu0 0.0
    %137 = vmatpush2.msra.mxu0 0.0
    %138 = vmatprep.subr.mxu0 0.0
    %139 = vmatpush2.msra.mxu0 0.0
    %140 = vmatprep.subr.mxu0 0.0
    %141 = vmatpush2.msra.mxu0 0.0
    %142 = vmatprep.subr.mxu0 0.0
    %143 = vmatpush2.msra.mxu0 0.0
    %144 = vmatprep.subr.mxu0 0.0
    %145 = vmatpush2.msra.mxu0 0.0
    %146 = vmatprep.subr.mxu0 0.0
    %147 = vmatpush2.msra.mxu0 0.0
    %148 = vmatprep.subr.mxu0 0.0
    %149 = vmatpush2.msra.mxu0 0.0
    %150 = vmatprep.subr.mxu0 0.0
    %151 = vmatpush2.msra.mxu0 0.0
    %152 = vmatprep.subr.mxu0 0.0
    %153 = vmatpush2.msra.mxu0 0.0
    %154 = vmatprep.subr.mxu0 0.0
    %155 = vmatpush2.msra.mxu0 0.0
    %156 = vmatprep.subr.mxu0 0.0
    %157 = vmatpush2.msra.mxu0 0.0
    %158 = vmatprep.subr.mxu0 0.0
    %159 = vmatpush2.msra.mxu0 0.0
    %160 = vmatprep.subr.mxu0 0.0
    %161 = vmatpush2.msra.mxu0 0.0
    %162 = vmatprep.subr.mxu0 0.0
    %163 = vmatpush2.msra.mxu0 0.0
    %164 = vmatprep.mubr.f32.mxu0 0.0
    %165 = vmatmul.mubr.f32.gmra.mxu0 %v89
    %v166 = vpop.f32.mrf.mxu0
    %v167 = vadd.f32 0.0, %v166
    %v168 = vpop.f32.mrf.mxu0
    %169 = vmatprep.mubr.f32.mxu0 0.0
    %170 = vmatmul.mubr.f32.gmra.mxu0 %v92
    %v171 = vpop.f32.mrf.mxu0
    %v172 = vadd.f32 0.0, %v171
    %v173 = vpop.f32.mrf.mxu0
    %174 = vmatprep.mubr.f32.mxu0 0.0
    %175 = vmatmul.mubr.f32.gmra.mxu0 %v95
    %v176 = vpop.f32.mrf.mxu0
    %v177 = vadd.f32 0.0, %v176
    %v178 = vpop.f32.mrf.mxu0
    %179 = vmatprep.mubr.f32.mxu0 0.0
    %180 = vmatmul.mubr.f32.gmra.mxu0 %v98
    %v181 = vpop.f32.mrf.mxu0
    %v182 = vadd.f32 0.0, %v181
    %v183 = vpop.f32.mrf.mxu0
    %184 = vdwg.mxu0
    %v185 = vld [vmem:[#allocation7] sm:$0xff]
    %v186 = vld [vmem:[#allocation7 + $0x8] sm:$0xff]
    %v187 = vld [vmem:[#allocation7 + $0x10] sm:$0xff]
    %v188 = vld [vmem:[#allocation7 + $0x18] sm:$0xff]
    %189 = vmatprep.subr.mxu0 0.0
    %190 = vmatpush1.msra.mxu0 0.0
    %191 = vmatprep.subr.mxu0 0.0
    %192 = vmatpush1.msra.mxu0 0.0
    %193 = vmatprep.subr.mxu0 0.0
    %194 = vmatpush1.msra.mxu0 0.0
    %195 = vmatprep.subr.mxu0 0.0
    %196 = vmatpush1.msra.mxu0 0.0
    %197 = vmatprep.subr.mxu0 0.0
    %198 = vmatpush1.msra.mxu0 0.0
    %199 = vmatprep.subr.mxu0 0.0
    %200 = vmatpush1.msra.mxu0 0.0
    %201 = vmatprep.subr.mxu0 0.0
    %202 = vmatpush1.msra.mxu0 0.0
    %203 = vmatprep.subr.mxu0 0.0
    %204 = vmatpush1.msra.mxu0 0.0
    %205 = vmatprep.subr.mxu0 0.0
    %206 = vmatpush1.msra.mxu0 0.0
    %207 = vmatprep.subr.mxu0 0.0
    %208 = vmatpush1.msra.mxu0 0.0
    %209 = vmatprep.subr.mxu0 0.0
    %210 = vmatpush1.msra.mxu0 0.0
    %211 = vmatprep.subr.mxu0 0.0
    %212 = vmatpush1.msra.mxu0 0.0
    %213 = vmatprep.subr.mxu0 0.0
    %214 = vmatpush1.msra.mxu0 %v188
    %215 = vmatprep.subr.mxu0 0.0
    %216 = vmatpush1.msra.mxu0 %v187
    %217 = vmatprep.subr.mxu0 0.0
    %218 = vmatpush1.msra.mxu0 %v186
    %219 = vmatprep.subr.mxu0 0.0
    %220 = vmatpush1.msra.mxu0 %v185
    %221 = vmatprep.subr.mxu0 0.0
    %222 = vmatpush2.msra.mxu0 0.0
    %223 = vmatprep.subr.mxu0 0.0
    %224 = vmatpush2.msra.mxu0 0.0
    %225 = vmatprep.subr.mxu0 0.0
    %226 = vmatpush2.msra.mxu0 0.0
    %227 = vmatprep.subr.mxu0 0.0
    %228 = vmatpush2.msra.mxu0 0.0
    %229 = vmatprep.subr.mxu0 0.0
    %230 = vmatpush2.msra.mxu0 0.0
    %231 = vmatprep.subr.mxu0 0.0
    %232 = vmatpush2.msra.mxu0 0.0
    %233 = vmatprep.subr.mxu0 0.0
    %234 = vmatpush2.msra.mxu0 0.0
    %235 = vmatprep.subr.mxu0 0.0
    %236 = vmatpush2.msra.mxu0 0.0
    %237 = vmatprep.subr.mxu0 0.0
    %238 = vmatpush2.msra.mxu0 0.0
    %239 = vmatprep.subr.mxu0 0.0
    %240 = vmatpush2.msra.mxu0 0.0
    %241 = vmatprep.subr.mxu0 0.0
    %242 = vmatpush2.msra.mxu0 0.0
    %243 = vmatprep.subr.mxu0 0.0
    %244 = vmatpush2.msra.mxu0 0.0
    %245 = vmatprep.subr.mxu0 0.0
    %246 = vmatpush2.msra.mxu0 0.0
    %247 = vmatprep.subr.mxu0 0.0
    %248 = vmatpush2.msra.mxu0 0.0
    %249 = vmatprep.subr.mxu0 0.0
    %250 = vmatpush2.msra.mxu0 0.0
    %251 = vmatprep.subr.mxu0 0.0
    %252 = vmatpush2.msra.mxu0 0.0
    %253 = vmatprep.mubr.f32.mxu0 0.0
    %254 = vmatmul.mubr.f32.gmra.mxu0 %v89
    %v255 = vpop.f32.mrf.mxu0
    %v256 = vadd.f32 0.0, %v255
    %v257 = vpop.f32.mrf.mxu0
    %258 = vmatprep.mubr.f32.mxu0 0.0
    %259 = vmatmul.mubr.f32.gmra.mxu0 %v92
    %v260 = vpop.f32.mrf.mxu0
    %v261 = vadd.f32 0.0, %v260
    %v262 = vpop.f32.mrf.mxu0
    %263 = vmatprep.mubr.f32.mxu0 0.0
    %264 = vmatmul.mubr.f32.gmra.mxu0 %v95
    %v265 = vpop.f32.mrf.mxu0
    %v266 = vadd.f32 0.0, %v265
    %v267 = vpop.f32.mrf.mxu0
    %268 = vmatprep.mubr.f32.mxu0 0.0
    %269 = vmatmul.mubr.f32.gmra.mxu0 %v98
    %v270 = vpop.f32.mrf.mxu0
    %v271 = vadd.f32 0.0, %v270
    %v272 = vpop.f32.mrf.mxu0
    %273 = vdwg.mxu0
    %s274 = scalar_lea.vmem [#allocation7], 32
    %v275 = vld [vmem:[%s274] sm:$0xff]
    %v276 = vld [vmem:[%s274 + $0x8] sm:$0xff]
    %v277 = vld [vmem:[%s274 + $0x10] sm:$0xff]
    %v278 = vld [vmem:[%s274 + $0x18] sm:$0xff]
    %279 = vmatprep.subr.mxu0 0.0
    %280 = vmatpush1.msra.mxu0 0.0
    %281 = vmatprep.subr.mxu0 0.0
    %282 = vmatpush1.msra.mxu0 0.0
    %283 = vmatprep.subr.mxu0 0.0
    %284 = vmatpush1.msra.mxu0 0.0
    %285 = vmatprep.subr.mxu0 0.0
    %286 = vmatpush1.msra.mxu0 0.0
    %287 = vmatprep.subr.mxu0 0.0
    %288 = vmatpush1.msra.mxu0 0.0
    %289 = vmatprep.subr.mxu0 0.0
    %290 = vmatpush1.msra.mxu0 0.0
    %291 = vmatprep.subr.mxu0 0.0
    %292 = vmatpush1.msra.mxu0 0.0
    %293 = vmatprep.subr.mxu0 0.0
    %294 = vmatpush1.msra.mxu0 0.0
    %295 = vmatprep.subr.mxu0 0.0
    %296 = vmatpush1.msra.mxu0 0.0
    %297 = vmatprep.subr.mxu0 0.0
    %298 = vmatpush1.msra.mxu0 0.0
    %299 = vmatprep.subr.mxu0 0.0
    %300 = vmatpush1.msra.mxu0 0.0
    %301 = vmatprep.subr.mxu0 0.0
    %302 = vmatpush1.msra.mxu0 0.0
    %303 = vmatprep.subr.mxu0 0.0
    %304 = vmatpush1.msra.mxu0 %v278
    %305 = vmatprep.subr.mxu0 0.0
    %306 = vmatpush1.msra.mxu0 %v277
    %307 = vmatprep.subr.mxu0 0.0
    %308 = vmatpush1.msra.mxu0 %v276
    %309 = vmatprep.subr.mxu0 0.0
    %310 = vmatpush1.msra.mxu0 %v275
    %311 = vmatprep.subr.mxu0 0.0
    %312 = vmatpush2.msra.mxu0 0.0
    %313 = vmatprep.subr.mxu0 0.0
    %314 = vmatpush2.msra.mxu0 0.0
    %315 = vmatprep.subr.mxu0 0.0
    %316 = vmatpush2.msra.mxu0 0.0
    %317 = vmatprep.subr.mxu0 0.0
    %318 = vmatpush2.msra.mxu0 0.0
    %319 = vmatprep.subr.mxu0 0.0
    %320 = vmatpush2.msra.mxu0 0.0
    %321 = vmatprep.subr.mxu0 0.0
    %322 = vmatpush2.msra.mxu0 0.0
    %323 = vmatprep.subr.mxu0 0.0
    %324 = vmatpush2.msra.mxu0 0.0
    %325 = vmatprep.subr.mxu0 0.0
    %326 = vmatpush2.msra.mxu0 0.0
    %327 = vmatprep.subr.mxu0 0.0
    %328 = vmatpush2.msra.mxu0 0.0
    %329 = vmatprep.subr.mxu0 0.0
    %330 = vmatpush2.msra.mxu0 0.0
    %331 = vmatprep.subr.mxu0 0.0
    %332 = vmatpush2.msra.mxu0 0.0
    %333 = vmatprep.subr.mxu0 0.0
    %334 = vmatpush2.msra.mxu0 0.0
    %335 = vmatprep.subr.mxu0 0.0
    %336 = vmatpush2.msra.mxu0 0.0
    %337 = vmatprep.subr.mxu0 0.0
    %338 = vmatpush2.msra.mxu0 0.0
    %339 = vmatprep.subr.mxu0 0.0
    %340 = vmatpush2.msra.mxu0 0.0
    %341 = vmatprep.subr.mxu0 0.0
    %342 = vmatpush2.msra.mxu0 0.0
    %343 = vmatprep.mubr.f32.mxu0 0.0
    %344 = vmatmul.mubr.f32.gmra.mxu0 %v89
    %v345 = vpop.f32.mrf.mxu0
    %v346 = vadd.f32 0.0, %v345
    %v347 = vpop.f32.mrf.mxu0
    %348 = vmatprep.mubr.f32.mxu0 0.0
    %349 = vmatmul.mubr.f32.gmra.mxu0 %v92
    %v350 = vpop.f32.mrf.mxu0
    %v351 = vadd.f32 0.0, %v350
    %v352 = vpop.f32.mrf.mxu0
    %353 = vmatprep.mubr.f32.mxu0 0.0
    %354 = vmatmul.mubr.f32.gmra.mxu0 %v95
    %v355 = vpop.f32.mrf.mxu0
    %v356 = vadd.f32 0.0, %v355
    %v357 = vpop.f32.mrf.mxu0
    %358 = vmatprep.mubr.f32.mxu0 0.0
    %359 = vmatmul.mubr.f32.gmra.mxu0 %v98
    %v360 = vpop.f32.mrf.mxu0
    %v361 = vadd.f32 0.0, %v360
    %v362 = vpop.f32.mrf.mxu0
    %363 = vdwg.mxu0
    %s364 = scalar_lea.vmem [#allocation7], 64
    %v365 = vld [vmem:[%s364] sm:$0xff]
    %v366 = vld [vmem:[%s364 + $0x8] sm:$0xff]
    %v367 = vld [vmem:[%s364 + $0x10] sm:$0xff]
    %v368 = vld [vmem:[%s364 + $0x18] sm:$0xff]
    %369 = vmatprep.subr.mxu0 0.0
    %370 = vmatpush1.msra.mxu0 0.0
    %371 = vmatprep.subr.mxu0 0.0
    %372 = vmatpush1.msra.mxu0 0.0
    %373 = vmatprep.subr.mxu0 0.0
    %374 = vmatpush1.msra.mxu0 0.0
    %375 = vmatprep.subr.mxu0 0.0
    %376 = vmatpush1.msra.mxu0 0.0
    %377 = vmatprep.subr.mxu0 0.0
    %378 = vmatpush1.msra.mxu0 0.0
    %379 = vmatprep.subr.mxu0 0.0
    %380 = vmatpush1.msra.mxu0 0.0
    %381 = vmatprep.subr.mxu0 0.0
    %382 = vmatpush1.msra.mxu0 0.0
    %383 = vmatprep.subr.mxu0 0.0
    %384 = vmatpush1.msra.mxu0 0.0
    %385 = vmatprep.subr.mxu0 0.0
    %386 = vmatpush1.msra.mxu0 0.0
    %387 = vmatprep.subr.mxu0 0.0
    %388 = vmatpush1.msra.mxu0 0.0
    %389 = vmatprep.subr.mxu0 0.0
    %390 = vmatpush1.msra.mxu0 0.0
    %391 = vmatprep.subr.mxu0 0.0
    %392 = vmatpush1.msra.mxu0 0.0
    %393 = vmatprep.subr.mxu0 0.0
    %394 = vmatpush1.msra.mxu0 %v368
    %395 = vmatprep.subr.mxu0 0.0
    %396 = vmatpush1.msra.mxu0 %v367
    %397 = vmatprep.subr.mxu0 0.0
    %398 = vmatpush1.msra.mxu0 %v366
    %399 = vmatprep.subr.mxu0 0.0
    %400 = vmatpush1.msra.mxu0 %v365
    %401 = vmatprep.subr.mxu0 0.0
    %402 = vmatpush2.msra.mxu0 0.0
    %403 = vmatprep.subr.mxu0 0.0
    %404 = vmatpush2.msra.mxu0 0.0
    %405 = vmatprep.subr.mxu0 0.0
    %406 = vmatpush2.msra.mxu0 0.0
    %407 = vmatprep.subr.mxu0 0.0
    %408 = vmatpush2.msra.mxu0 0.0
    %409 = vmatprep.subr.mxu0 0.0
    %410 = vmatpush2.msra.mxu0 0.0
    %411 = vmatprep.subr.mxu0 0.0
    %412 = vmatpush2.msra.mxu0 0.0
    %413 = vmatprep.subr.mxu0 0.0
    %414 = vmatpush2.msra.mxu0 0.0
    %415 = vmatprep.subr.mxu0 0.0
    %416 = vmatpush2.msra.mxu0 0.0
    %417 = vmatprep.subr.mxu0 0.0
    %418 = vmatpush2.msra.mxu0 0.0
    %419 = vmatprep.subr.mxu0 0.0
    %420 = vmatpush2.msra.mxu0 0.0
    %421 = vmatprep.subr.mxu0 0.0
    %422 = vmatpush2.msra.mxu0 0.0
    %423 = vmatprep.subr.mxu0 0.0
    %424 = vmatpush2.msra.mxu0 0.0
    %425 = vmatprep.subr.mxu0 0.0
    %426 = vmatpush2.msra.mxu0 0.0
    %427 = vmatprep.subr.mxu0 0.0
    %428 = vmatpush2.msra.mxu0 0.0
    %429 = vmatprep.subr.mxu0 0.0
    %430 = vmatpush2.msra.mxu0 0.0
    %431 = vmatprep.subr.mxu0 0.0
    %432 = vmatpush2.msra.mxu0 0.0
    %433 = vmatprep.mubr.f32.mxu0 0.0
    %434 = vmatmul.mubr.f32.gmra.mxu0 %v89
    %v435 = vpop.f32.mrf.mxu0
    %v436 = vadd.f32 0.0, %v435
    %v437 = vpop.f32.mrf.mxu0
    %438 = vmatprep.mubr.f32.mxu0 0.0
    %439 = vmatmul.mubr.f32.gmra.mxu0 %v92
    %v440 = vpop.f32.mrf.mxu0
    %v441 = vadd.f32 0.0, %v440
    %v442 = vpop.f32.mrf.mxu0
    %443 = vmatprep.mubr.f32.mxu0 0.0
    %444 = vmatmul.mubr.f32.gmra.mxu0 %v95
    %v445 = vpop.f32.mrf.mxu0
    %v446 = vadd.f32 0.0, %v445
    %v447 = vpop.f32.mrf.mxu0
    %448 = vmatprep.mubr.f32.mxu0 0.0
    %449 = vmatmul.mubr.f32.gmra.mxu0 %v98
    %v450 = vpop.f32.mrf.mxu0
    %v451 = vadd.f32 0.0, %v450
    %v452 = vpop.f32.mrf.mxu0
    %453 = vdwg.mxu0
    %v454 = vld [vmem:[%s3] sm:$0x1]
    %v455 = vlaneseq
    %v456 = vshrl.u32 %v455, 7
    %vm457 = vcmp.gt.s32.totalorder %v456, 0
    %v458 = vsel %vm457, 1, 0
    %vm459 = vcmp.eq.s32.totalorder %v458, 1
    %vm464 = vcmask 1040384
    %v465 = vrot.slane %v256, 7
    %v466 = vrot.slane %v261, 7
    %v467 = vsel %vm464, %v465, %v466
    %v468 = vrot.slane %v266, 7
    %v469 = vrot.slane %v271, 7
    %v470 = vsel %vm464, %v468, %v469
    %v473 = vsel %vm459, %v467, 0.0
    %v474 = vsel %vm459, %v470, 0.0
    %vm475 = vcmp.lt.s32.totalorder %v456, 7
    %v476 = vsel %vm475, 1, 0
    %vm477 = vcmp.eq.s32.totalorder %v476, 1
    %vm482 = vcmask 1046528
    %v483 = vrot.slane %v436, 1
    %v484 = vrot.slane %v441, 1
    %v485 = vsel %vm482, %v483, %v484
    %v486 = vrot.slane %v446, 1
    %v487 = vrot.slane %v451, 1
    %v488 = vsel %vm482, %v486, %v487
    %v491 = vsel %vm477, %v485, 0.0
    %v492 = vsel %vm477, %v488, 0.0
    %v493 = vadd.f32 %v473, %v346
    %v494 = vadd.f32 %v474, %v356
    %v495 = vadd.f32 %v493, %v441
    %v496 = vadd.f32 %v494, %v451
    %v498 = vlaneseq
    %v499 = vshrl.u32 %v498, 7
    %v500 = vsub.s32 0, %v499
    %v501 = vrot.slane %v454, %v500
    %v503 = vadd.f32 %v495, %v501
    %v504 = vadd.f32 %v496, %v501
    %v505 = vmax.f32 %v503, 0.0
    %v506 = vmax.f32 %v504, 0.0
    %v507 = vadd.f32 %v256, %v351
    %v508 = vadd.f32 %v266, %v361
    %v509 = vadd.f32 %v507, %v491
    %v510 = vadd.f32 %v508, %v492
    %v511 = vadd.f32 %v509, %v501
    %v512 = vadd.f32 %v510, %v501
    %v513 = vmax.f32 %v511, 0.0
    %v514 = vmax.f32 %v512, 0.0
    %v515 = vmax.f32 %v505, %v513
    %v516 = vmax.f32 %v506, %v514
    %vm517 = vcmask 64512
    %v519 = vsel %vm517, %v167, 0
    %v522 = vsel %vm517, %v172, 0
    %v525 = vsel %vm517, %v515, 0
    %527 = vmatprep.subr.mxu0 0.0
    %528 = vmatpush1.xpose.msra.mxu0 0.0
    %529 = vmatprep.subr.mxu0 0.0
    %530 = vmatpush1.xpose.msra.mxu0 0.0
    %531 = vmatprep.subr.mxu0 0.0
    %532 = vmatpush1.xpose.msra.mxu0 0.0
    %533 = vmatprep.subr.mxu0 0.0
    %534 = vmatpush1.xpose.msra.mxu0 0.0
    %535 = vmatprep.subr.mxu0 0.0
    %536 = vmatpush1.xpose.msra.mxu0 0.0
    %537 = vmatprep.subr.mxu0 0.0
    %538 = vmatpush1.xpose.msra.mxu0 0.0
    %539 = vmatprep.subr.mxu0 0.0
    %540 = vmatpush1.xpose.msra.mxu0 0.0
    %541 = vmatprep.subr.mxu0 0.0
    %542 = vmatpush1.xpose.msra.mxu0 0.0
    %543 = vmatprep.subr.mxu0 0.0
    %544 = vmatpush1.xpose.msra.mxu0 0.0
    %545 = vmatprep.subr.mxu0 0.0
    %546 = vmatpush1.xpose.msra.mxu0 0.0
    %547 = vmatprep.subr.mxu0 0.0
    %548 = vmatpush1.xpose.msra.mxu0 0.0
    %549 = vmatprep.subr.mxu0 0.0
    %550 = vmatpush1.xpose.msra.mxu0 0.0
    %551 = vmatprep.subr.mxu0 0.0
    %552 = vmatpush1.xpose.msra.mxu0 0.0
    %553 = vmatprep.subr.mxu0 0.0
    %554 = vmatpush1.xpose.msra.mxu0 0.0
    %555 = vmatprep.subr.mxu0 0.0
    %556 = vmatpush1.xpose.msra.mxu0 0.0
    %557 = vmatprep.subr.mxu0 0.0
    %558 = vmatpush1.xpose.msra.mxu0 %v525
    %559 = vmatprep.subr.mxu0 0.0
    %560 = vmatpush2.xpose.msra.mxu0 0.0
    %561 = vmatprep.subr.mxu0 0.0
    %562 = vmatpush2.xpose.msra.mxu0 0.0
    %563 = vmatprep.subr.mxu0 0.0
    %564 = vmatpush2.xpose.msra.mxu0 0.0
    %565 = vmatprep.subr.mxu0 0.0
    %566 = vmatpush2.xpose.msra.mxu0 0.0
    %567 = vmatprep.subr.mxu0 0.0
    %568 = vmatpush2.xpose.msra.mxu0 0.0
    %569 = vmatprep.subr.mxu0 0.0
    %570 = vmatpush2.xpose.msra.mxu0 0.0
    %571 = vmatprep.subr.mxu0 0.0
    %572 = vmatpush2.xpose.msra.mxu0 0.0
    %573 = vmatprep.subr.mxu0 0.0
    %574 = vmatpush2.xpose.msra.mxu0 0.0
    %575 = vmatprep.subr.mxu0 0.0
    %576 = vmatpush2.xpose.msra.mxu0 0.0
    %577 = vmatprep.subr.mxu0 0.0
    %578 = vmatpush2.xpose.msra.mxu0 0.0
    %579 = vmatprep.subr.mxu0 0.0
    %580 = vmatpush2.xpose.msra.mxu0 0.0
    %581 = vmatprep.subr.mxu0 0.0
    %582 = vmatpush2.xpose.msra.mxu0 0.0
    %583 = vmatprep.subr.mxu0 0.0
    %584 = vmatpush2.xpose.msra.mxu0 0.0
    %585 = vmatprep.subr.mxu0 0.0
    %586 = vmatpush2.xpose.msra.mxu0 0.0
    %587 = vmatprep.subr.mxu0 0.0
    %588 = vmatpush2.xpose.msra.mxu0 0.0
    %589 = vmatprep.subr.mxu0 0.0
    %590 = vmatpush2.xpose.msra.mxu0 0.0
    %591 = vmatprep.mubr.f32.mxu0 0.0
    %592 = vmatmul.mubr.f32.gmra.mxu0 %v519
    %v593 = vpop.f32.mrf.mxu0
    %v594 = vadd.f32 0.0, %v593
    %v595 = vpop.f32.mrf.mxu0
    %596 = vmatprep.mubr.f32.mxu0 0.0
    %597 = vmatmul.mubr.f32.gmra.mxu0 %v522
    %v598 = vpop.f32.mrf.mxu0
    %v599 = vadd.f32 0.0, %v598
    %v600 = vpop.f32.mrf.mxu0
    %601 = vdwg.mxu0
    %v603 = vsel %vm517, %v177, 0
    %v606 = vsel %vm517, %v182, 0
    %v609 = vsel %vm517, %v516, 0
    %611 = vmatprep.subr.mxu0 0.0
    %612 = vmatpush1.xpose.msra.mxu0 0.0
    %613 = vmatprep.subr.mxu0 0.0
    %614 = vmatpush1.xpose.msra.mxu0 0.0
    %615 = vmatprep.subr.mxu0 0.0
    %616 = vmatpush1.xpose.msra.mxu0 0.0
    %617 = vmatprep.subr.mxu0 0.0
    %618 = vmatpush1.xpose.msra.mxu0 0.0
    %619 = vmatprep.subr.mxu0 0.0
    %620 = vmatpush1.xpose.msra.mxu0 0.0
    %621 = vmatprep.subr.mxu0 0.0
    %622 = vmatpush1.xpose.msra.mxu0 0.0
    %623 = vmatprep.subr.mxu0 0.0
    %624 = vmatpush1.xpose.msra.mxu0 0.0
    %625 = vmatprep.subr.mxu0 0.0
    %626 = vmatpush1.xpose.msra.mxu0 0.0
    %627 = vmatprep.subr.mxu0 0.0
    %628 = vmatpush1.xpose.msra.mxu0 0.0
    %629 = vmatprep.subr.mxu0 0.0
    %630 = vmatpush1.xpose.msra.mxu0 0.0
    %631 = vmatprep.subr.mxu0 0.0
    %632 = vmatpush1.xpose.msra.mxu0 0.0
    %633 = vmatprep.subr.mxu0 0.0
    %634 = vmatpush1.xpose.msra.mxu0 0.0
    %635 = vmatprep.subr.mxu0 0.0
    %636 = vmatpush1.xpose.msra.mxu0 0.0
    %637 = vmatprep.subr.mxu0 0.0
    %638 = vmatpush1.xpose.msra.mxu0 0.0
    %639 = vmatprep.subr.mxu0 0.0
    %640 = vmatpush1.xpose.msra.mxu0 0.0
    %641 = vmatprep.subr.mxu0 0.0
    %642 = vmatpush1.xpose.msra.mxu0 %v609
    %643 = vmatprep.subr.mxu0 0.0
    %644 = vmatpush2.xpose.msra.mxu0 0.0
    %645 = vmatprep.subr.mxu0 0.0
    %646 = vmatpush2.xpose.msra.mxu0 0.0
    %647 = vmatprep.subr.mxu0 0.0
    %648 = vmatpush2.xpose.msra.mxu0 0.0
    %649 = vmatprep.subr.mxu0 0.0
    %650 = vmatpush2.xpose.msra.mxu0 0.0
    %651 = vmatprep.subr.mxu0 0.0
    %652 = vmatpush2.xpose.msra.mxu0 0.0
    %653 = vmatprep.subr.mxu0 0.0
    %654 = vmatpush2.xpose.msra.mxu0 0.0
    %655 = vmatprep.subr.mxu0 0.0
    %656 = vmatpush2.xpose.msra.mxu0 0.0
    %657 = vmatprep.subr.mxu0 0.0
    %658 = vmatpush2.xpose.msra.mxu0 0.0
    %659 = vmatprep.subr.mxu0 0.0
    %660 = vmatpush2.xpose.msra.mxu0 0.0
    %661 = vmatprep.subr.mxu0 0.0
    %662 = vmatpush2.xpose.msra.mxu0 0.0
    %663 = vmatprep.subr.mxu0 0.0
    %664 = vmatpush2.xpose.msra.mxu0 0.0
    %665 = vmatprep.subr.mxu0 0.0
    %666 = vmatpush2.xpose.msra.mxu0 0.0
    %667 = vmatprep.subr.mxu0 0.0
    %668 = vmatpush2.xpose.msra.mxu0 0.0
    %669 = vmatprep.subr.mxu0 0.0
    %670 = vmatpush2.xpose.msra.mxu0 0.0
    %671 = vmatprep.subr.mxu0 0.0
    %672 = vmatpush2.xpose.msra.mxu0 0.0
    %673 = vmatprep.subr.mxu0 0.0
    %674 = vmatpush2.xpose.msra.mxu0 0.0
    %675 = vmatprep.mubr.f32.mxu0 0.0
    %676 = vmatmul.mubr.f32.gmra.mxu0 %v603
    %v677 = vpop.f32.mrf.mxu0
    %v678 = vadd.f32 0.0, %v677
    %v679 = vpop.f32.mrf.mxu0
    %680 = vmatprep.mubr.f32.mxu0 0.0
    %681 = vmatmul.mubr.f32.gmra.mxu0 %v606
    %v682 = vpop.f32.mrf.mxu0
    %v683 = vadd.f32 0.0, %v682
    %v684 = vpop.f32.mrf.mxu0
    %685 = vdwg.mxu0
    %v686 = vmul.f32 %v594, 0.35355338
    %v687 = vmul.f32 %v599, 0.35355338
    %v688 = vmul.f32 %v678, 0.35355338
    %v689 = vmul.f32 %v683, 0.35355338
    %v690 = vsel %vm517, %v686, -inf
    %691 = vmax.xlane.f32.xlu0 %v690
    %v692 = vpop.xlane.xlu0 %691
    %v693 = vsel %vm517, %v687, -inf
    %694 = vmax.xlane.f32.xlu0 %v693
    %v695 = vpop.xlane.xlu0 %694
    %v696 = vsel %vm517, %v688, -inf
    %697 = vmax.xlane.f32.xlu0 %v696
    %v698 = vpop.xlane.xlu0 %697
    %v699 = vsel %vm517, %v689, -inf
    %700 = vmax.xlane.f32.xlu0 %v699
    %v701 = vpop.xlane.xlu0 %700
    %v702 = vsub.f32 %v686, %v692
    %v703 = vsub.f32 %v687, %v695
    %v704 = vsub.f32 %v688, %v698
    %v705 = vsub.f32 %v689, %v701
    %v706 = vmul.f32 %v702, 1.442695
    %v707 = vpow.pop %v706
    %v708 = vmul.f32 %v703, 1.442695
    %v709 = vpow.pop %v708
    %v710 = vmul.f32 %v704, 1.442695
    %v711 = vpow.pop %v710
    %v712 = vmul.f32 %v705, 1.442695
    %v713 = vpow.pop %v712
    %v714 = vsel %vm517, %v707, 0.0
    %715 = vadd.xlane.f32.xlu0 %v714
    %v716 = vpop.xlane.xlu0 %715
    %v717 = vsel %vm517, %v709, 0.0
    %718 = vadd.xlane.f32.xlu0 %v717
    %v719 = vpop.xlane.xlu0 %718
    %v720 = vsel %vm517, %v711, 0.0
    %721 = vadd.xlane.f32.xlu0 %v720
    %v722 = vpop.xlane.xlu0 %721
    %v723 = vsel %vm517, %v713, 0.0
    %724 = vadd.xlane.f32.xlu0 %v723
    %v725 = vpop.xlane.xlu0 %724
    %v726 = vrcp.pop %v716
    %v727 = vrcp.pop %v719
    %v728 = vrcp.pop %v722
    %v729 = vrcp.pop %v725
    %v730 = vmul.f32 %v707, %v726
    %v731 = vmul.f32 %v709, %v727
    %v732 = vmul.f32 %v711, %v728
    %v733 = vmul.f32 %v713, %v729
    %v735 = vsel %vm517, %v730, 0
    %v738 = vsel %vm517, %v731, 0
    %740 = vmatprep.subr.mxu0 0.0
    %741 = vmatpush1.msra.mxu0 0.0
    %742 = vmatprep.subr.mxu0 0.0
    %743 = vmatpush1.msra.mxu0 0.0
    %744 = vmatprep.subr.mxu0 0.0
    %745 = vmatpush1.msra.mxu0 0.0
    %746 = vmatprep.subr.mxu0 0.0
    %747 = vmatpush1.msra.mxu0 0.0
    %748 = vmatprep.subr.mxu0 0.0
    %749 = vmatpush1.msra.mxu0 0.0
    %750 = vmatprep.subr.mxu0 0.0
    %751 = vmatpush1.msra.mxu0 0.0
    %752 = vmatprep.subr.mxu0 0.0
    %753 = vmatpush1.msra.mxu0 0.0
    %754 = vmatprep.subr.mxu0 0.0
    %755 = vmatpush1.msra.mxu0 0.0
    %756 = vmatprep.subr.mxu0 0.0
    %757 = vmatpush1.msra.mxu0 0.0
    %758 = vmatprep.subr.mxu0 0.0
    %759 = vmatpush1.msra.mxu0 0.0
    %760 = vmatprep.subr.mxu0 0.0
    %761 = vmatpush1.msra.mxu0 0.0
    %762 = vmatprep.subr.mxu0 0.0
    %763 = vmatpush1.msra.mxu0 0.0
    %764 = vmatprep.subr.mxu0 0.0
    %765 = vmatpush1.msra.mxu0 0.0
    %766 = vmatprep.subr.mxu0 0.0
    %767 = vmatpush1.msra.mxu0 0.0
    %768 = vmatprep.subr.mxu0 0.0
    %769 = vmatpush1.msra.mxu0 0.0
    %770 = vmatprep.subr.mxu0 0.0
    %771 = vmatpush1.msra.mxu0 %v515
    %772 = vmatprep.subr.mxu0 0.0
    %773 = vmatpush2.msra.mxu0 0.0
    %774 = vmatprep.subr.mxu0 0.0
    %775 = vmatpush2.msra.mxu0 0.0
    %776 = vmatprep.subr.mxu0 0.0
    %777 = vmatpush2.msra.mxu0 0.0
    %778 = vmatprep.subr.mxu0 0.0
    %779 = vmatpush2.msra.mxu0 0.0
    %780 = vmatprep.subr.mxu0 0.0
    %781 = vmatpush2.msra.mxu0 0.0
    %782 = vmatprep.subr.mxu0 0.0
    %783 = vmatpush2.msra.mxu0 0.0
    %784 = vmatprep.subr.mxu0 0.0
    %785 = vmatpush2.msra.mxu0 0.0
    %786 = vmatprep.subr.mxu0 0.0
    %787 = vmatpush2.msra.mxu0 0.0
    %788 = vmatprep.subr.mxu0 0.0
    %789 = vmatpush2.msra.mxu0 0.0
    %790 = vmatprep.subr.mxu0 0.0
    %791 = vmatpush2.msra.mxu0 0.0
    %792 = vmatprep.subr.mxu0 0.0
    %793 = vmatpush2.msra.mxu0 0.0
    %794 = vmatprep.subr.mxu0 0.0
    %795 = vmatpush2.msra.mxu0 0.0
    %796 = vmatprep.subr.mxu0 0.0
    %797 = vmatpush2.msra.mxu0 0.0
    %798 = vmatprep.subr.mxu0 0.0
    %799 = vmatpush2.msra.mxu0 0.0
    %800 = vmatprep.subr.mxu0 0.0
    %801 = vmatpush2.msra.mxu0 0.0
    %802 = vmatprep.subr.mxu0 0.0
    %803 = vmatpush2.msra.mxu0 0.0
    %804 = vmatprep.mubr.f32.mxu0 0.0
    %805 = vmatmul.mubr.f32.gmra.mxu0 %v735
    %v806 = vpop.f32.mrf.mxu0
    %v807 = vadd.f32 0.0, %v806
    %v808 = vpop.f32.mrf.mxu0
    %809 = vmatprep.mubr.f32.mxu0 0.0
    %810 = vmatmul.mubr.f32.gmra.mxu0 %v738
    %v811 = vpop.f32.mrf.mxu0
    %v812 = vadd.f32 0.0, %v811
    %v813 = vpop.f32.mrf.mxu0
    %814 = vdwg.mxu0
    %v816 = vsel %vm517, %v732, 0
    %v819 = vsel %vm517, %v733, 0
    %821 = vmatprep.subr.mxu0 0.0
    %822 = vmatpush1.msra.mxu0 0.0
    %823 = vmatprep.subr.mxu0 0.0
    %824 = vmatpush1.msra.mxu0 0.0
    %825 = vmatprep.subr.mxu0 0.0
    %826 = vmatpush1.msra.mxu0 0.0
    %827 = vmatprep.subr.mxu0 0.0
    %828 = vmatpush1.msra.mxu0 0.0
    %829 = vmatprep.subr.mxu0 0.0
    %830 = vmatpush1.msra.mxu0 0.0
    %831 = vmatprep.subr.mxu0 0.0
    %832 = vmatpush1.msra.mxu0 0.0
    %833 = vmatprep.subr.mxu0 0.0
    %834 = vmatpush1.msra.mxu0 0.0
    %835 = vmatprep.subr.mxu0 0.0
    %836 = vmatpush1.msra.mxu0 0.0
    %837 = vmatprep.subr.mxu0 0.0
    %838 = vmatpush1.msra.mxu0 0.0
    %839 = vmatprep.subr.mxu0 0.0
    %840 = vmatpush1.msra.mxu0 0.0
    %841 = vmatprep.subr.mxu0 0.0
    %842 = vmatpush1.msra.mxu0 0.0
    %843 = vmatprep.subr.mxu0 0.0
    %844 = vmatpush1.msra.mxu0 0.0
    %845 = vmatprep.subr.mxu0 0.0
    %846 = vmatpush1.msra.mxu0 0.0
    %847 = vmatprep.subr.mxu0 0.0
    %848 = vmatpush1.msra.mxu0 0.0
    %849 = vmatprep.subr.mxu0 0.0
    %850 = vmatpush1.msra.mxu0 0.0
    %851 = vmatprep.subr.mxu0 0.0
    %852 = vmatpush1.msra.mxu0 %v516
    %853 = vmatprep.subr.mxu0 0.0
    %854 = vmatpush2.msra.mxu0 0.0
    %855 = vmatprep.subr.mxu0 0.0
    %856 = vmatpush2.msra.mxu0 0.0
    %857 = vmatprep.subr.mxu0 0.0
    %858 = vmatpush2.msra.mxu0 0.0
    %859 = vmatprep.subr.mxu0 0.0
    %860 = vmatpush2.msra.mxu0 0.0
    %861 = vmatprep.subr.mxu0 0.0
    %862 = vmatpush2.msra.mxu0 0.0
    %863 = vmatprep.subr.mxu0 0.0
    %864 = vmatpush2.msra.mxu0 0.0
    %865 = vmatprep.subr.mxu0 0.0
    %866 = vmatpush2.msra.mxu0 0.0
    %867 = vmatprep.subr.mxu0 0.0
    %868 = vmatpush2.msra.mxu0 0.0
    %869 = vmatprep.subr.mxu0 0.0
    %870 = vmatpush2.msra.mxu0 0.0
    %871 = vmatprep.subr.mxu0 0.0
    %872 = vmatpush2.msra.mxu0 0.0
    %873 = vmatprep.subr.mxu0 0.0
    %874 = vmatpush2.msra.mxu0 0.0
    %875 = vmatprep.subr.mxu0 0.0
    %876 = vmatpush2.msra.mxu0 0.0
    %877 = vmatprep.subr.mxu0 0.0
    %878 = vmatpush2.msra.mxu0 0.0
    %879 = vmatprep.subr.mxu0 0.0
    %880 = vmatpush2.msra.mxu0 0.0
    %881 = vmatprep.subr.mxu0 0.0
    %882 = vmatpush2.msra.mxu0 0.0
    %883 = vmatprep.subr.mxu0 0.0
    %884 = vmatpush2.msra.mxu0 0.0
    %885 = vmatprep.mubr.f32.mxu0 0.0
    %886 = vmatmul.mubr.f32.gmra.mxu0 %v816
    %v887 = vpop.f32.mrf.mxu0
    %v888 = vadd.f32 0.0, %v887
    %v889 = vpop.f32.mrf.mxu0
    %890 = vmatprep.mubr.f32.mxu0 0.0
    %891 = vmatmul.mubr.f32.gmra.mxu0 %v819
    %v892 = vpop.f32.mrf.mxu0
    %v893 = vadd.f32 0.0, %v892
    %v894 = vpop.f32.mrf.mxu0
    %895 = vdwg.mxu0
    %v896 = vld [vmem:[#allocation8] sm:$0xff]
    %897 = vrot.lane.b32.xlu0 %v167, 120
    %v898 = vpop.permute.xlu0 %897
    %899 = vrot.lane.b32.xlu0 %v172, 120
    %v900 = vpop.permute.xlu0 %899
    %901 = vrot.lane.b32.xlu0 %v515, 120
    %v902 = vpop.permute.xlu0 %901
    %v903 = vsel %vm517, %v898, 0
    %v905 = vsel %vm517, %v900, 0
    %v907 = vsel %vm517, %v902, 0
    %909 = vmatprep.subr.mxu0 0.0
    %910 = vmatpush1.xpose.msra.mxu0 0.0
    %911 = vmatprep.subr.mxu0 0.0
    %912 = vmatpush1.xpose.msra.mxu0 0.0
    %913 = vmatprep.subr.mxu0 0.0
    %914 = vmatpush1.xpose.msra.mxu0 0.0
    %915 = vmatprep.subr.mxu0 0.0
    %916 = vmatpush1.xpose.msra.mxu0 0.0
    %917 = vmatprep.subr.mxu0 0.0
    %918 = vmatpush1.xpose.msra.mxu0 0.0
    %919 = vmatprep.subr.mxu0 0.0
    %920 = vmatpush1.xpose.msra.mxu0 0.0
    %921 = vmatprep.subr.mxu0 0.0
    %922 = vmatpush1.xpose.msra.mxu0 0.0
    %923 = vmatprep.subr.mxu0 0.0
    %924 = vmatpush1.xpose.msra.mxu0 0.0
    %925 = vmatprep.subr.mxu0 0.0
    %926 = vmatpush1.xpose.msra.mxu0 0.0
    %927 = vmatprep.subr.mxu0 0.0
    %928 = vmatpush1.xpose.msra.mxu0 0.0
    %929 = vmatprep.subr.mxu0 0.0
    %930 = vmatpush1.xpose.msra.mxu0 0.0
    %931 = vmatprep.subr.mxu0 0.0
    %932 = vmatpush1.xpose.msra.mxu0 0.0
    %933 = vmatprep.subr.mxu0 0.0
    %934 = vmatpush1.xpose.msra.mxu0 0.0
    %935 = vmatprep.subr.mxu0 0.0
    %936 = vmatpush1.xpose.msra.mxu0 0.0
    %937 = vmatprep.subr.mxu0 0.0
    %938 = vmatpush1.xpose.msra.mxu0 0.0
    %939 = vmatprep.subr.mxu0 0.0
    %940 = vmatpush1.xpose.msra.mxu0 %v907
    %941 = vmatprep.subr.mxu0 0.0
    %942 = vmatpush2.xpose.msra.mxu0 0.0
    %943 = vmatprep.subr.mxu0 0.0
    %944 = vmatpush2.xpose.msra.mxu0 0.0
    %945 = vmatprep.subr.mxu0 0.0
    %946 = vmatpush2.xpose.msra.mxu0 0.0
    %947 = vmatprep.subr.mxu0 0.0
    %948 = vmatpush2.xpose.msra.mxu0 0.0
    %949 = vmatprep.subr.mxu0 0.0
    %950 = vmatpush2.xpose.msra.mxu0 0.0
    %951 = vmatprep.subr.mxu0 0.0
    %952 = vmatpush2.xpose.msra.mxu0 0.0
    %953 = vmatprep.subr.mxu0 0.0
    %954 = vmatpush2.xpose.msra.mxu0 0.0
    %955 = vmatprep.subr.mxu0 0.0
    %956 = vmatpush2.xpose.msra.mxu0 0.0
    %957 = vmatprep.subr.mxu0 0.0
    %958 = vmatpush2.xpose.msra.mxu0 0.0
    %959 = vmatprep.subr.mxu0 0.0
    %960 = vmatpush2.xpose.msra.mxu0 0.0
    %961 = vmatprep.subr.mxu0 0.0
    %962 = vmatpush2.xpose.msra.mxu0 0.0
    %963 = vmatprep.subr.mxu0 0.0
    %964 = vmatpush2.xpose.msra.mxu0 0.0
    %965 = vmatprep.subr.mxu0 0.0
    %966 = vmatpush2.xpose.msra.mxu0 0.0
    %967 = vmatprep.subr.mxu0 0.0
    %968 = vmatpush2.xpose.msra.mxu0 0.0
    %969 = vmatprep.subr.mxu0 0.0
    %970 = vmatpush2.xpose.msra.mxu0 0.0
    %971 = vmatprep.subr.mxu0 0.0
    %972 = vmatpush2.xpose.msra.mxu0 0.0
    %973 = vmatprep.mubr.f32.mxu0 0.0
    %974 = vmatmul.mubr.f32.gmra.mxu0 %v903
    %v975 = vpop.f32.mrf.mxu0
    %v976 = vadd.f32 0.0, %v975
    %v977 = vpop.f32.mrf.mxu0
    %978 = vmatprep.mubr.f32.mxu0 0.0
    %979 = vmatmul.mubr.f32.gmra.mxu0 %v905
    %v980 = vpop.f32.mrf.mxu0
    %v981 = vadd.f32 0.0, %v980
    %v982 = vpop.f32.mrf.mxu0
    %983 = vdwg.mxu0
    %984 = vrot.lane.b32.xlu0 %v177, 120
    %v985 = vpop.permute.xlu0 %984
    %986 = vrot.lane.b32.xlu0 %v182, 120
    %v987 = vpop.permute.xlu0 %986
    %988 = vrot.lane.b32.xlu0 %v516, 120
    %v989 = vpop.permute.xlu0 %988
    %v990 = vsel %vm517, %v985, 0
    %v992 = vsel %vm517, %v987, 0
    %v994 = vsel %vm517, %v989, 0
    %996 = vmatprep.subr.mxu0 0.0
    %997 = vmatpush1.xpose.msra.mxu0 0.0
    %998 = vmatprep.subr.mxu0 0.0
    %999 = vmatpush1.xpose.msra.mxu0 0.0
    %1000 = vmatprep.subr.mxu0 0.0
    %1001 = vmatpush1.xpose.msra.mxu0 0.0
    %1002 = vmatprep.subr.mxu0 0.0
    %1003 = vmatpush1.xpose.msra.mxu0 0.0
    %1004 = vmatprep.subr.mxu0 0.0
    %1005 = vmatpush1.xpose.msra.mxu0 0.0
    %1006 = vmatprep.subr.mxu0 0.0
    %1007 = vmatpush1.xpose.msra.mxu0 0.0
    %1008 = vmatprep.subr.mxu0 0.0
    %1009 = vmatpush1.xpose.msra.mxu0 0.0
    %1010 = vmatprep.subr.mxu0 0.0
    %1011 = vmatpush1.xpose.msra.mxu0 0.0
    %1012 = vmatprep.subr.mxu0 0.0
    %1013 = vmatpush1.xpose.msra.mxu0 0.0
    %1014 = vmatprep.subr.mxu0 0.0
    %1015 = vmatpush1.xpose.msra.mxu0 0.0
    %1016 = vmatprep.subr.mxu0 0.0
    %1017 = vmatpush1.xpose.msra.mxu0 0.0
    %1018 = vmatprep.subr.mxu0 0.0
    %1019 = vmatpush1.xpose.msra.mxu0 0.0
    %1020 = vmatprep.subr.mxu0 0.0
    %1021 = vmatpush1.xpose.msra.mxu0 0.0
    %1022 = vmatprep.subr.mxu0 0.0
    %1023 = vmatpush1.xpose.msra.mxu0 0.0
    %1024 = vmatprep.subr.mxu0 0.0
    %1025 = vmatpush1.xpose.msra.mxu0 0.0
    %1026 = vmatprep.subr.mxu0 0.0
    %1027 = vmatpush1.xpose.msra.mxu0 %v994
    %1028 = vmatprep.subr.mxu0 0.0
    %1029 = vmatpush2.xpose.msra.mxu0 0.0
    %1030 = vmatprep.subr.mxu0 0.0
    %1031 = vmatpush2.xpose.msra.mxu0 0.0
    %1032 = vmatprep.subr.mxu0 0.0
    %1033 = vmatpush2.xpose.msra.mxu0 0.0
    %1034 = vmatprep.subr.mxu0 0.0
    %1035 = vmatpush2.xpose.msra.mxu0 0.0
    %1036 = vmatprep.subr.mxu0 0.0
    %1037 = vmatpush2.xpose.msra.mxu0 0.0
    %1038 = vmatprep.subr.mxu0 0.0
    %1039 = vmatpush2.xpose.msra.mxu0 0.0
    %1040 = vmatprep.subr.mxu0 0.0
    %1041 = vmatpush2.xpose.msra.mxu0 0.0
    %1042 = vmatprep.subr.mxu0 0.0
    %1043 = vmatpush2.xpose.msra.mxu0 0.0
    %1044 = vmatprep.subr.mxu0 0.0
    %1045 = vmatpush2.xpose.msra.mxu0 0.0
    %1046 = vmatprep.subr.mxu0 0.0
    %1047 = vmatpush2.xpose.msra.mxu0 0.0
    %1048 = vmatprep.subr.mxu0 0.0
    %1049 = vmatpush2.xpose.msra.mxu0 0.0
    %1050 = vmatprep.subr.mxu0 0.0
    %1051 = vmatpush2.xpose.msra.mxu0 0.0
    %1052 = vmatprep.subr.mxu0 0.0
    %1053 = vmatpush2.xpose.msra.mxu0 0.0
    %1054 = vmatprep.subr.mxu0 0.0
    %1055 = vmatpush2.xpose.msra.mxu0 0.0
    %1056 = vmatprep.subr.mxu0 0.0
    %1057 = vmatpush2.xpose.msra.mxu0 0.0
    %1058 = vmatprep.subr.mxu0 0.0
    %1059 = vmatpush2.xpose.msra.mxu0 0.0
    %1060 = vmatprep.mubr.f32.mxu0 0.0
    %1061 = vmatmul.mubr.f32.gmra.mxu0 %v990
    %v1062 = vpop.f32.mrf.mxu0
    %v1063 = vadd.f32 0.0, %v1062
    %v1064 = vpop.f32.mrf.mxu0
    %1065 = vmatprep.mubr.f32.mxu0 0.0
    %1066 = vmatmul.mubr.f32.gmra.mxu0 %v992
    %v1067 = vpop.f32.mrf.mxu0
    %v1068 = vadd.f32 0.0, %v1067
    %v1069 = vpop.f32.mrf.mxu0
    %1070 = vdwg.mxu0
    %v1071 = vmul.f32 %v976, 0.35355338
    %v1072 = vmul.f32 %v981, 0.35355338
    %v1073 = vmul.f32 %v1063, 0.35355338
    %v1074 = vmul.f32 %v1068, 0.35355338
    %v1075 = vsel %vm517, %v1071, -inf
    %1076 = vmax.xlane.f32.xlu0 %v1075
    %v1077 = vpop.xlane.xlu0 %1076
    %v1078 = vsel %vm517, %v1072, -inf
    %1079 = vmax.xlane.f32.xlu0 %v1078
    %v1080 = vpop.xlane.xlu0 %1079
    %v1081 = vsel %vm517, %v1073, -inf
    %1082 = vmax.xlane.f32.xlu0 %v1081
    %v1083 = vpop.xlane.xlu0 %1082
    %v1084 = vsel %vm517, %v1074, -inf
    %1085 = vmax.xlane.f32.xlu0 %v1084
    %v1086 = vpop.xlane.xlu0 %1085
    %v1087 = vsub.f32 %v1071, %v1077
    %v1088 = vsub.f32 %v1072, %v1080
    %v1089 = vsub.f32 %v1073, %v1083
    %v1090 = vsub.f32 %v1074, %v1086
    %v1091 = vmul.f32 %v1087, 1.442695
    %v1092 = vpow.pop %v1091
    %v1093 = vmul.f32 %v1088, 1.442695
    %v1094 = vpow.pop %v1093
    %v1095 = vmul.f32 %v1089, 1.442695
    %v1096 = vpow.pop %v1095
    %v1097 = vmul.f32 %v1090, 1.442695
    %v1098 = vpow.pop %v1097
    %v1099 = vsel %vm517, %v1092, 0.0
    %1100 = vadd.xlane.f32.xlu0 %v1099
    %v1101 = vpop.xlane.xlu0 %1100
    %v1102 = vsel %vm517, %v1094, 0.0
    %1103 = vadd.xlane.f32.xlu0 %v1102
    %v1104 = vpop.xlane.xlu0 %1103
    %v1105 = vsel %vm517, %v1096, 0.0
    %1106 = vadd.xlane.f32.xlu0 %v1105
    %v1107 = vpop.xlane.xlu0 %1106
    %v1108 = vsel %vm517, %v1098, 0.0
    %1109 = vadd.xlane.f32.xlu0 %v1108
    %v1110 = vpop.xlane.xlu0 %1109
    %v1111 = vrcp.pop %v1101
    %v1112 = vrcp.pop %v1104
    %v1113 = vrcp.pop %v1107
    %v1114 = vrcp.pop %v1110
    %v1115 = vmul.f32 %v1092, %v1111
    %v1116 = vmul.f32 %v1094, %v1112
    %v1117 = vmul.f32 %v1096, %v1113
    %v1118 = vmul.f32 %v1098, %v1114
    %v1121 = vsel %vm517, %v1115, 0
    %v1124 = vsel %vm517, %v1116, 0
    %1126 = vmatprep.subr.mxu0 0.0
    %1127 = vmatpush1.msra.mxu0 0.0
    %1128 = vmatprep.subr.mxu0 0.0
    %1129 = vmatpush1.msra.mxu0 0.0
    %1130 = vmatprep.subr.mxu0 0.0
    %1131 = vmatpush1.msra.mxu0 0.0
    %1132 = vmatprep.subr.mxu0 0.0
    %1133 = vmatpush1.msra.mxu0 0.0
    %1134 = vmatprep.subr.mxu0 0.0
    %1135 = vmatpush1.msra.mxu0 0.0
    %1136 = vmatprep.subr.mxu0 0.0
    %1137 = vmatpush1.msra.mxu0 0.0
    %1138 = vmatprep.subr.mxu0 0.0
    %1139 = vmatpush1.msra.mxu0 0.0
    %1140 = vmatprep.subr.mxu0 0.0
    %1141 = vmatpush1.msra.mxu0 0.0
    %1142 = vmatprep.subr.mxu0 0.0
    %1143 = vmatpush1.msra.mxu0 0.0
    %1144 = vmatprep.subr.mxu0 0.0
    %1145 = vmatpush1.msra.mxu0 0.0
    %1146 = vmatprep.subr.mxu0 0.0
    %1147 = vmatpush1.msra.mxu0 0.0
    %1148 = vmatprep.subr.mxu0 0.0
    %1149 = vmatpush1.msra.mxu0 0.0
    %1150 = vmatprep.subr.mxu0 0.0
    %1151 = vmatpush1.msra.mxu0 0.0
    %1152 = vmatprep.subr.mxu0 0.0
    %1153 = vmatpush1.msra.mxu0 0.0
    %1154 = vmatprep.subr.mxu0 0.0
    %1155 = vmatpush1.msra.mxu0 0.0
    %1156 = vmatprep.subr.mxu0 0.0
    %1157 = vmatpush1.msra.mxu0 %v902
    %1158 = vmatprep.subr.mxu0 0.0
    %1159 = vmatpush2.msra.mxu0 0.0
    %1160 = vmatprep.subr.mxu0 0.0
    %1161 = vmatpush2.msra.mxu0 0.0
    %1162 = vmatprep.subr.mxu0 0.0
    %1163 = vmatpush2.msra.mxu0 0.0
    %1164 = vmatprep.subr.mxu0 0.0
    %1165 = vmatpush2.msra.mxu0 0.0
    %1166 = vmatprep.subr.mxu0 0.0
    %1167 = vmatpush2.msra.mxu0 0.0
    %1168 = vmatprep.subr.mxu0 0.0
    %1169 = vmatpush2.msra.mxu0 0.0
    %1170 = vmatprep.subr.mxu0 0.0
    %1171 = vmatpush2.msra.mxu0 0.0
    %1172 = vmatprep.subr.mxu0 0.0
    %1173 = vmatpush2.msra.mxu0 0.0
    %1174 = vmatprep.subr.mxu0 0.0
    %1175 = vmatpush2.msra.mxu0 0.0
    %1176 = vmatprep.subr.mxu0 0.0
    %1177 = vmatpush2.msra.mxu0 0.0
    %1178 = vmatprep.subr.mxu0 0.0
    %1179 = vmatpush2.msra.mxu0 0.0
    %1180 = vmatprep.subr.mxu0 0.0
    %1181 = vmatpush2.msra.mxu0 0.0
    %1182 = vmatprep.subr.mxu0 0.0
    %1183 = vmatpush2.msra.mxu0 0.0
    %1184 = vmatprep.subr.mxu0 0.0
    %1185 = vmatpush2.msra.mxu0 0.0
    %1186 = vmatprep.subr.mxu0 0.0
    %1187 = vmatpush2.msra.mxu0 0.0
    %1188 = vmatprep.subr.mxu0 0.0
    %1189 = vmatpush2.msra.mxu0 0.0
    %1190 = vmatprep.mubr.f32.mxu0 0.0
    %1191 = vmatmul.mubr.f32.gmra.mxu0 %v1121
    %v1192 = vpop.f32.mrf.mxu0
    %v1193 = vadd.f32 0.0, %v1192
    %v1194 = vpop.f32.mrf.mxu0
    %1195 = vmatprep.mubr.f32.mxu0 0.0
    %1196 = vmatmul.mubr.f32.gmra.mxu0 %v1124
    %v1197 = vpop.f32.mrf.mxu0
    %v1198 = vadd.f32 0.0, %v1197
    %v1199 = vpop.f32.mrf.mxu0
    %1200 = vdwg.mxu0
    %v1203 = vsel %vm517, %v1117, 0
    %v1206 = vsel %vm517, %v1118, 0
    %1208 = vmatprep.subr.mxu0 0.0
    %1209 = vmatpush1.msra.mxu0 0.0
    %1210 = vmatprep.subr.mxu0 0.0
    %1211 = vmatpush1.msra.mxu0 0.0
    %1212 = vmatprep.subr.mxu0 0.0
    %1213 = vmatpush1.msra.mxu0 0.0
    %1214 = vmatprep.subr.mxu0 0.0
    %1215 = vmatpush1.msra.mxu0 0.0
    %1216 = vmatprep.subr.mxu0 0.0
    %1217 = vmatpush1.msra.mxu0 0.0
    %1218 = vmatprep.subr.mxu0 0.0
    %1219 = vmatpush1.msra.mxu0 0.0
    %1220 = vmatprep.subr.mxu0 0.0
    %1221 = vmatpush1.msra.mxu0 0.0
    %1222 = vmatprep.subr.mxu0 0.0
    %1223 = vmatpush1.msra.mxu0 0.0
    %1224 = vmatprep.subr.mxu0 0.0
    %1225 = vmatpush1.msra.mxu0 0.0
    %1226 = vmatprep.subr.mxu0 0.0
    %1227 = vmatpush1.msra.mxu0 0.0
    %1228 = vmatprep.subr.mxu0 0.0
    %1229 = vmatpush1.msra.mxu0 0.0
    %1230 = vmatprep.subr.mxu0 0.0
    %1231 = vmatpush1.msra.mxu0 0.0
    %1232 = vmatprep.subr.mxu0 0.0
    %1233 = vmatpush1.msra.mxu0 0.0
    %1234 = vmatprep.subr.mxu0 0.0
    %1235 = vmatpush1.msra.mxu0 0.0
    %1236 = vmatprep.subr.mxu0 0.0
    %1237 = vmatpush1.msra.mxu0 0.0
    %1238 = vmatprep.subr.mxu0 0.0
    %1239 = vmatpush1.msra.mxu0 %v989
    %1240 = vmatprep.subr.mxu0 0.0
    %1241 = vmatpush2.msra.mxu0 0.0
    %1242 = vmatprep.subr.mxu0 0.0
    %1243 = vmatpush2.msra.mxu0 0.0
    %1244 = vmatprep.subr.mxu0 0.0
    %1245 = vmatpush2.msra.mxu0 0.0
    %1246 = vmatprep.subr.mxu0 0.0
    %1247 = vmatpush2.msra.mxu0 0.0
    %1248 = vmatprep.subr.mxu0 0.0
    %1249 = vmatpush2.msra.mxu0 0.0
    %1250 = vmatprep.subr.mxu0 0.0
    %1251 = vmatpush2.msra.mxu0 0.0
    %1252 = vmatprep.subr.mxu0 0.0
    %1253 = vmatpush2.msra.mxu0 0.0
    %1254 = vmatprep.subr.mxu0 0.0
    %1255 = vmatpush2.msra.mxu0 0.0
    %1256 = vmatprep.subr.mxu0 0.0
    %1257 = vmatpush2.msra.mxu0 0.0
    %1258 = vmatprep.subr.mxu0 0.0
    %1259 = vmatpush2.msra.mxu0 0.0
    %1260 = vmatprep.subr.mxu0 0.0
    %1261 = vmatpush2.msra.mxu0 0.0
    %1262 = vmatprep.subr.mxu0 0.0
    %1263 = vmatpush2.msra.mxu0 0.0
    %1264 = vmatprep.subr.mxu0 0.0
    %1265 = vmatpush2.msra.mxu0 0.0
    %1266 = vmatprep.subr.mxu0 0.0
    %1267 = vmatpush2.msra.mxu0 0.0
    %1268 = vmatprep.subr.mxu0 0.0
    %1269 = vmatpush2.msra.mxu0 0.0
    %1270 = vmatprep.subr.mxu0 0.0
    %1271 = vmatpush2.msra.mxu0 0.0
    %1272 = vmatprep.mubr.f32.mxu0 0.0
    %1273 = vmatmul.mubr.f32.gmra.mxu0 %v1203
    %v1274 = vpop.f32.mrf.mxu0
    %v1275 = vadd.f32 0.0, %v1274
    %v1276 = vpop.f32.mrf.mxu0
    %1277 = vmatprep.mubr.f32.mxu0 0.0
    %1278 = vmatmul.mubr.f32.gmra.mxu0 %v1206
    %v1279 = vpop.f32.mrf.mxu0
    %v1280 = vadd.f32 0.0, %v1279
    %v1281 = vpop.f32.mrf.mxu0
    %1282 = vdwg.mxu0
    %v1283 = vld [vmem:[#allocation8 + $0x8] sm:$0xff]
    %v1285 = vsel %vm517, %v1193, 0
    %v1288 = vsel %vm517, %v1198, 0
    %v1291 = vsel %vm517, %v1275, 0
    %v1294 = vsel %vm517, %v1280, 0
    %1296 = vmatprep.subr.mxu0 0.0
    %1297 = vmatpush1.msra.mxu0 0.0
    %1298 = vmatprep.subr.mxu0 0.0
    %1299 = vmatpush1.msra.mxu0 0.0
    %1300 = vmatprep.subr.mxu0 0.0
    %1301 = vmatpush1.msra.mxu0 0.0
    %1302 = vmatprep.subr.mxu0 0.0
    %1303 = vmatpush1.msra.mxu0 0.0
    %1304 = vmatprep.subr.mxu0 0.0
    %1305 = vmatpush1.msra.mxu0 0.0
    %1306 = vmatprep.subr.mxu0 0.0
    %1307 = vmatpush1.msra.mxu0 0.0
    %1308 = vmatprep.subr.mxu0 0.0
    %1309 = vmatpush1.msra.mxu0 0.0
    %1310 = vmatprep.subr.mxu0 0.0
    %1311 = vmatpush1.msra.mxu0 0.0
    %1312 = vmatprep.subr.mxu0 0.0
    %1313 = vmatpush1.msra.mxu0 0.0
    %1314 = vmatprep.subr.mxu0 0.0
    %1315 = vmatpush1.msra.mxu0 0.0
    %1316 = vmatprep.subr.mxu0 0.0
    %1317 = vmatpush1.msra.mxu0 0.0
    %1318 = vmatprep.subr.mxu0 0.0
    %1319 = vmatpush1.msra.mxu0 0.0
    %1320 = vmatprep.subr.mxu0 0.0
    %1321 = vmatpush1.msra.mxu0 0.0
    %1322 = vmatprep.subr.mxu0 0.0
    %1323 = vmatpush1.msra.mxu0 0.0
    %1324 = vmatprep.subr.mxu0 0.0
    %1325 = vmatpush1.msra.mxu0 0.0
    %1326 = vmatprep.subr.mxu0 0.0
    %1327 = vmatpush1.msra.mxu0 %v1283
    %1328 = vmatprep.subr.mxu0 0.0
    %1329 = vmatpush2.msra.mxu0 0.0
    %1330 = vmatprep.subr.mxu0 0.0
    %1331 = vmatpush2.msra.mxu0 0.0
    %1332 = vmatprep.subr.mxu0 0.0
    %1333 = vmatpush2.msra.mxu0 0.0
    %1334 = vmatprep.subr.mxu0 0.0
    %1335 = vmatpush2.msra.mxu0 0.0
    %1336 = vmatprep.subr.mxu0 0.0
    %1337 = vmatpush2.msra.mxu0 0.0
    %1338 = vmatprep.subr.mxu0 0.0
    %1339 = vmatpush2.msra.mxu0 0.0
    %1340 = vmatprep.subr.mxu0 0.0
    %1341 = vmatpush2.msra.mxu0 0.0
    %1342 = vmatprep.subr.mxu0 0.0
    %1343 = vmatpush2.msra.mxu0 0.0
    %1344 = vmatprep.subr.mxu0 0.0
    %1345 = vmatpush2.msra.mxu0 0.0
    %1346 = vmatprep.subr.mxu0 0.0
    %1347 = vmatpush2.msra.mxu0 0.0
    %1348 = vmatprep.subr.mxu0 0.0
    %1349 = vmatpush2.msra.mxu0 0.0
    %1350 = vmatprep.subr.mxu0 0.0
    %1351 = vmatpush2.msra.mxu0 0.0
    %1352 = vmatprep.subr.mxu0 0.0
    %1353 = vmatpush2.msra.mxu0 0.0
    %1354 = vmatprep.subr.mxu0 0.0
    %1355 = vmatpush2.msra.mxu0 0.0
    %1356 = vmatprep.subr.mxu0 0.0
    %1357 = vmatpush2.msra.mxu0 0.0
    %1358 = vmatprep.subr.mxu0 0.0
    %1359 = vmatpush2.msra.mxu0 0.0
    %1360 = vmatprep.mubr.f32.mxu0 0.0
    %1361 = vmatmul.mubr.f32.gmra.mxu0 %v1285
    %v1362 = vpop.f32.mrf.mxu0
    %v1363 = vadd.f32 0.0, %v1362
    %v1364 = vpop.f32.mrf.mxu0
    %1365 = vmatprep.mubr.f32.mxu0 0.0
    %1366 = vmatmul.mubr.f32.gmra.mxu0 %v1288
    %v1367 = vpop.f32.mrf.mxu0
    %v1368 = vadd.f32 0.0, %v1367
    %v1369 = vpop.f32.mrf.mxu0
    %1370 = vmatprep.mubr.f32.mxu0 0.0
    %1371 = vmatmul.mubr.f32.gmra.mxu0 %v1291
    %v1372 = vpop.f32.mrf.mxu0
    %v1373 = vadd.f32 0.0, %v1372
    %v1374 = vpop.f32.mrf.mxu0
    %1375 = vmatprep.mubr.f32.mxu0 0.0
    %1376 = vmatmul.mubr.f32.gmra.mxu0 %v1294
    %v1377 = vpop.f32.mrf.mxu0
    %v1378 = vadd.f32 0.0, %v1377
    %v1379 = vpop.f32.mrf.mxu0
    %1380 = vdwg.mxu0
    %v1382 = vsel %vm517, %v807, 0
    %v1385 = vsel %vm517, %v812, 0
    %v1388 = vsel %vm517, %v888, 0
    %v1391 = vsel %vm517, %v893, 0
    %1393 = vmatprep.subr.mxu0 0.0
    %1394 = vmatpush1.msra.mxu0 0.0
    %1395 = vmatprep.subr.mxu0 0.0
    %1396 = vmatpush1.msra.mxu0 0.0
    %1397 = vmatprep.subr.mxu0 0.0
    %1398 = vmatpush1.msra.mxu0 0.0
    %1399 = vmatprep.subr.mxu0 0.0
    %1400 = vmatpush1.msra.mxu0 0.0
    %1401 = vmatprep.subr.mxu0 0.0
    %1402 = vmatpush1.msra.mxu0 0.0
    %1403 = vmatprep.subr.mxu0 0.0
    %1404 = vmatpush1.msra.mxu0 0.0
    %1405 = vmatprep.subr.mxu0 0.0
    %1406 = vmatpush1.msra.mxu0 0.0
    %1407 = vmatprep.subr.mxu0 0.0
    %1408 = vmatpush1.msra.mxu0 0.0
    %1409 = vmatprep.subr.mxu0 0.0
    %1410 = vmatpush1.msra.mxu0 0.0
    %1411 = vmatprep.subr.mxu0 0.0
    %1412 = vmatpush1.msra.mxu0 0.0
    %1413 = vmatprep.subr.mxu0 0.0
    %1414 = vmatpush1.msra.mxu0 0.0
    %1415 = vmatprep.subr.mxu0 0.0
    %1416 = vmatpush1.msra.mxu0 0.0
    %1417 = vmatprep.subr.mxu0 0.0
    %1418 = vmatpush1.msra.mxu0 0.0
    %1419 = vmatprep.subr.mxu0 0.0
    %1420 = vmatpush1.msra.mxu0 0.0
    %1421 = vmatprep.subr.mxu0 0.0
    %1422 = vmatpush1.msra.mxu0 0.0
    %1423 = vmatprep.subr.mxu0 0.0
    %1424 = vmatpush1.msra.mxu0 %v896
    %1425 = vmatprep.subr.mxu0 0.0
    %1426 = vmatpush2.msra.mxu0 0.0
    %1427 = vmatprep.subr.mxu0 0.0
    %1428 = vmatpush2.msra.mxu0 0.0
    %1429 = vmatprep.subr.mxu0 0.0
    %1430 = vmatpush2.msra.mxu0 0.0
    %1431 = vmatprep.subr.mxu0 0.0
    %1432 = vmatpush2.msra.mxu0 0.0
    %1433 = vmatprep.subr.mxu0 0.0
    %1434 = vmatpush2.msra.mxu0 0.0
    %1435 = vmatprep.subr.mxu0 0.0
    %1436 = vmatpush2.msra.mxu0 0.0
    %1437 = vmatprep.subr.mxu0 0.0
    %1438 = vmatpush2.msra.mxu0 0.0
    %1439 = vmatprep.subr.mxu0 0.0
    %1440 = vmatpush2.msra.mxu0 0.0
    %1441 = vmatprep.subr.mxu0 0.0
    %1442 = vmatpush2.msra.mxu0 0.0
    %1443 = vmatprep.subr.mxu0 0.0
    %1444 = vmatpush2.msra.mxu0 0.0
    %1445 = vmatprep.subr.mxu0 0.0
    %1446 = vmatpush2.msra.mxu0 0.0
    %1447 = vmatprep.subr.mxu0 0.0
    %1448 = vmatpush2.msra.mxu0 0.0
    %1449 = vmatprep.subr.mxu0 0.0
    %1450 = vmatpush2.msra.mxu0 0.0
    %1451 = vmatprep.subr.mxu0 0.0
    %1452 = vmatpush2.msra.mxu0 0.0
    %1453 = vmatprep.subr.mxu0 0.0
    %1454 = vmatpush2.msra.mxu0 0.0
    %1455 = vmatprep.subr.mxu0 0.0
    %1456 = vmatpush2.msra.mxu0 0.0
    %1457 = vmatprep.mubr.f32.mxu0 0.0
    %1458 = vmatmul.mubr.f32.gmra.mxu0 %v1382
    %v1459 = vpop.f32.mrf.mxu0
    %v1460 = vadd.f32 %v1363, %v1459
    %v1461 = vpop.f32.mrf.mxu0
    %1462 = vmatprep.mubr.f32.mxu0 0.0
    %1463 = vmatmul.mubr.f32.gmra.mxu0 %v1385
    %v1464 = vpop.f32.mrf.mxu0
    %v1465 = vadd.f32 %v1368, %v1464
    %v1466 = vpop.f32.mrf.mxu0
    %1467 = vmatprep.mubr.f32.mxu0 0.0
    %1468 = vmatmul.mubr.f32.gmra.mxu0 %v1388
    %v1469 = vpop.f32.mrf.mxu0
    %v1470 = vadd.f32 %v1373, %v1469
    %v1471 = vpop.f32.mrf.mxu0
    %1472 = vmatprep.mubr.f32.mxu0 0.0
    %1473 = vmatmul.mubr.f32.gmra.mxu0 %v1391
    %v1474 = vpop.f32.mrf.mxu0
    %v1475 = vadd.f32 %v1378, %v1474
    %v1476 = vpop.f32.mrf.mxu0
    %1477 = vdwg.mxu0
    %1478 = vrot.lane.b32.xlu0 %v167, 112
    %v1479 = vpop.permute.xlu0 %1478
    %1480 = vrot.lane.b32.xlu0 %v172, 112
    %v1481 = vpop.permute.xlu0 %1480
    %1482 = vrot.lane.b32.xlu0 %v515, 112
    %v1483 = vpop.permute.xlu0 %1482
    %v1484 = vsel %vm517, %v1479, 0
    %v1486 = vsel %vm517, %v1481, 0
    %v1488 = vsel %vm517, %v1483, 0
    %1490 = vmatprep.subr.mxu0 0.0
    %1491 = vmatpush1.xpose.msra.mxu0 0.0
    %1492 = vmatprep.subr.mxu0 0.0
    %1493 = vmatpush1.xpose.msra.mxu0 0.0
    %1494 = vmatprep.subr.mxu0 0.0
    %1495 = vmatpush1.xpose.msra.mxu0 0.0
    %1496 = vmatprep.subr.mxu0 0.0
    %1497 = vmatpush1.xpose.msra.mxu0 0.0
    %1498 = vmatprep.subr.mxu0 0.0
    %1499 = vmatpush1.xpose.msra.mxu0 0.0
    %1500 = vmatprep.subr.mxu0 0.0
    %1501 = vmatpush1.xpose.msra.mxu0 0.0
    %1502 = vmatprep.subr.mxu0 0.0
    %1503 = vmatpush1.xpose.msra.mxu0 0.0
    %1504 = vmatprep.subr.mxu0 0.0
    %1505 = vmatpush1.xpose.msra.mxu0 0.0
    %1506 = vmatprep.subr.mxu0 0.0
    %1507 = vmatpush1.xpose.msra.mxu0 0.0
    %1508 = vmatprep.subr.mxu0 0.0
    %1509 = vmatpush1.xpose.msra.mxu0 0.0
    %1510 = vmatprep.subr.mxu0 0.0
    %1511 = vmatpush1.xpose.msra.mxu0 0.0
    %1512 = vmatprep.subr.mxu0 0.0
    %1513 = vmatpush1.xpose.msra.mxu0 0.0
    %1514 = vmatprep.subr.mxu0 0.0
    %1515 = vmatpush1.xpose.msra.mxu0 0.0
    %1516 = vmatprep.subr.mxu0 0.0
    %1517 = vmatpush1.xpose.msra.mxu0 0.0
    %1518 = vmatprep.subr.mxu0 0.0
    %1519 = vmatpush1.xpose.msra.mxu0 0.0
    %1520 = vmatprep.subr.mxu0 0.0
    %1521 = vmatpush1.xpose.msra.mxu0 %v1488
    %1522 = vmatprep.subr.mxu0 0.0
    %1523 = vmatpush2.xpose.msra.mxu0 0.0
    %1524 = vmatprep.subr.mxu0 0.0
    %1525 = vmatpush2.xpose.msra.mxu0 0.0
    %1526 = vmatprep.subr.mxu0 0.0
    %1527 = vmatpush2.xpose.msra.mxu0 0.0
    %1528 = vmatprep.subr.mxu0 0.0
    %1529 = vmatpush2.xpose.msra.mxu0 0.0
    %1530 = vmatprep.subr.mxu0 0.0
    %1531 = vmatpush2.xpose.msra.mxu0 0.0
    %1532 = vmatprep.subr.mxu0 0.0
    %1533 = vmatpush2.xpose.msra.mxu0 0.0
    %1534 = vmatprep.subr.mxu0 0.0
    %1535 = vmatpush2.xpose.msra.mxu0 0.0
    %1536 = vmatprep.subr.mxu0 0.0
    %1537 = vmatpush2.xpose.msra.mxu0 0.0
    %1538 = vmatprep.subr.mxu0 0.0
    %1539 = vmatpush2.xpose.msra.mxu0 0.0
    %1540 = vmatprep.subr.mxu0 0.0
    %1541 = vmatpush2.xpose.msra.mxu0 0.0
    %1542 = vmatprep.subr.mxu0 0.0
    %1543 = vmatpush2.xpose.msra.mxu0 0.0
    %1544 = vmatprep.subr.mxu0 0.0
    %1545 = vmatpush2.xpose.msra.mxu0 0.0
    %1546 = vmatprep.subr.mxu0 0.0
    %1547 = vmatpush2.xpose.msra.mxu0 0.0
    %1548 = vmatprep.subr.mxu0 0.0
    %1549 = vmatpush2.xpose.msra.mxu0 0.0
    %1550 = vmatprep.subr.mxu0 0.0
    %1551 = vmatpush2.xpose.msra.mxu0 0.0
    %1552 = vmatprep.subr.mxu0 0.0
    %1553 = vmatpush2.xpose.msra.mxu0 0.0
    %1554 = vmatprep.mubr.f32.mxu0 0.0
    %1555 = vmatmul.mubr.f32.gmra.mxu0 %v1484
    %v1556 = vpop.f32.mrf.mxu0
    %v1557 = vadd.f32 0.0, %v1556
    %v1558 = vpop.f32.mrf.mxu0
    %1559 = vmatprep.mubr.f32.mxu0 0.0
    %1560 = vmatmul.mubr.f32.gmra.mxu0 %v1486
    %v1561 = vpop.f32.mrf.mxu0
    %v1562 = vadd.f32 0.0, %v1561
    %v1563 = vpop.f32.mrf.mxu0
    %1564 = vdwg.mxu0
    %1565 = vrot.lane.b32.xlu0 %v177, 112
    %v1566 = vpop.permute.xlu0 %1565
    %1567 = vrot.lane.b32.xlu0 %v182, 112
    %v1568 = vpop.permute.xlu0 %1567
    %1569 = vrot.lane.b32.xlu0 %v516, 112
    %v1570 = vpop.permute.xlu0 %1569
    %v1571 = vsel %vm517, %v1566, 0
    %v1573 = vsel %vm517, %v1568, 0
    %v1575 = vsel %vm517, %v1570, 0
    %1577 = vmatprep.subr.mxu0 0.0
    %1578 = vmatpush1.xpose.msra.mxu0 0.0
    %1579 = vmatprep.subr.mxu0 0.0
    %1580 = vmatpush1.xpose.msra.mxu0 0.0
    %1581 = vmatprep.subr.mxu0 0.0
    %1582 = vmatpush1.xpose.msra.mxu0 0.0
    %1583 = vmatprep.subr.mxu0 0.0
    %1584 = vmatpush1.xpose.msra.mxu0 0.0
    %1585 = vmatprep.subr.mxu0 0.0
    %1586 = vmatpush1.xpose.msra.mxu0 0.0
    %1587 = vmatprep.subr.mxu0 0.0
    %1588 = vmatpush1.xpose.msra.mxu0 0.0
    %1589 = vmatprep.subr.mxu0 0.0
    %1590 = vmatpush1.xpose.msra.mxu0 0.0
    %1591 = vmatprep.subr.mxu0 0.0
    %1592 = vmatpush1.xpose.msra.mxu0 0.0
    %1593 = vmatprep.subr.mxu0 0.0
    %1594 = vmatpush1.xpose.msra.mxu0 0.0
    %1595 = vmatprep.subr.mxu0 0.0
    %1596 = vmatpush1.xpose.msra.mxu0 0.0
    %1597 = vmatprep.subr.mxu0 0.0
    %1598 = vmatpush1.xpose.msra.mxu0 0.0
    %1599 = vmatprep.subr.mxu0 0.0
    %1600 = vmatpush1.xpose.msra.mxu0 0.0
    %1601 = vmatprep.subr.mxu0 0.0
    %1602 = vmatpush1.xpose.msra.mxu0 0.0
    %1603 = vmatprep.subr.mxu0 0.0
    %1604 = vmatpush1.xpose.msra.mxu0 0.0
    %1605 = vmatprep.subr.mxu0 0.0
    %1606 = vmatpush1.xpose.msra.mxu0 0.0
    %1607 = vmatprep.subr.mxu0 0.0
    %1608 = vmatpush1.xpose.msra.mxu0 %v1575
    %1609 = vmatprep.subr.mxu0 0.0
    %1610 = vmatpush2.xpose.msra.mxu0 0.0
    %1611 = vmatprep.subr.mxu0 0.0
    %1612 = vmatpush2.xpose.msra.mxu0 0.0
    %1613 = vmatprep.subr.mxu0 0.0
    %1614 = vmatpush2.xpose.msra.mxu0 0.0
    %1615 = vmatprep.subr.mxu0 0.0
    %1616 = vmatpush2.xpose.msra.mxu0 0.0
    %1617 = vmatprep.subr.mxu0 0.0
    %1618 = vmatpush2.xpose.msra.mxu0 0.0
    %1619 = vmatprep.subr.mxu0 0.0
    %1620 = vmatpush2.xpose.msra.mxu0 0.0
    %1621 = vmatprep.subr.mxu0 0.0
    %1622 = vmatpush2.xpose.msra.mxu0 0.0
    %1623 = vmatprep.subr.mxu0 0.0
    %1624 = vmatpush2.xpose.msra.mxu0 0.0
    %1625 = vmatprep.subr.mxu0 0.0
    %1626 = vmatpush2.xpose.msra.mxu0 0.0
    %1627 = vmatprep.subr.mxu0 0.0
    %1628 = vmatpush2.xpose.msra.mxu0 0.0
    %1629 = vmatprep.subr.mxu0 0.0
    %1630 = vmatpush2.xpose.msra.mxu0 0.0
    %1631 = vmatprep.subr.mxu0 0.0
    %1632 = vmatpush2.xpose.msra.mxu0 0.0
    %1633 = vmatprep.subr.mxu0 0.0
    %1634 = vmatpush2.xpose.msra.mxu0 0.0
    %1635 = vmatprep.subr.mxu0 0.0
    %1636 = vmatpush2.xpose.msra.mxu0 0.0
    %1637 = vmatprep.subr.mxu0 0.0
    %1638 = vmatpush2.xpose.msra.mxu0 0.0
    %1639 = vmatprep.subr.mxu0 0.0
    %1640 = vmatpush2.xpose.msra.mxu0 0.0
    %1641 = vmatprep.mubr.f32.mxu0 0.0
    %1642 = vmatmul.mubr.f32.gmra.mxu0 %v1571
    %v1643 = vpop.f32.mrf.mxu0
    %v1644 = vadd.f32 0.0, %v1643
    %v1645 = vpop.f32.mrf.mxu0
    %1646 = vmatprep.mubr.f32.mxu0 0.0
    %1647 = vmatmul.mubr.f32.gmra.mxu0 %v1573
    %v1648 = vpop.f32.mrf.mxu0
    %v1649 = vadd.f32 0.0, %v1648
    %v1650 = vpop.f32.mrf.mxu0
    %1651 = vdwg.mxu0
    %v1652 = vmul.f32 %v1557, 0.35355338
    %v1653 = vmul.f32 %v1562, 0.35355338
    %v1654 = vmul.f32 %v1644, 0.35355338
    %v1655 = vmul.f32 %v1649, 0.35355338
    %v1656 = vsel %vm517, %v1652, -inf
    %1657 = vmax.xlane.f32.xlu0 %v1656
    %v1658 = vpop.xlane.xlu0 %1657
    %v1659 = vsel %vm517, %v1653, -inf
    %1660 = vmax.xlane.f32.xlu0 %v1659
    %v1661 = vpop.xlane.xlu0 %1660
    %v1662 = vsel %vm517, %v1654, -inf
    %1663 = vmax.xlane.f32.xlu0 %v1662
    %v1664 = vpop.xlane.xlu0 %1663
    %v1665 = vsel %vm517, %v1655, -inf
    %1666 = vmax.xlane.f32.xlu0 %v1665
    %v1667 = vpop.xlane.xlu0 %1666
    %v1668 = vsub.f32 %v1652, %v1658
    %v1669 = vsub.f32 %v1653, %v1661
    %v1670 = vsub.f32 %v1654, %v1664
    %v1671 = vsub.f32 %v1655, %v1667
    %v1672 = vmul.f32 %v1668, 1.442695
    %v1673 = vpow.pop %v1672
    %v1674 = vmul.f32 %v1669, 1.442695
    %v1675 = vpow.pop %v1674
    %v1676 = vmul.f32 %v1670, 1.442695
    %v1677 = vpow.pop %v1676
    %v1678 = vmul.f32 %v1671, 1.442695
    %v1679 = vpow.pop %v1678
    %v1680 = vsel %vm517, %v1673, 0.0
    %1681 = vadd.xlane.f32.xlu0 %v1680
    %v1682 = vpop.xlane.xlu0 %1681
    %v1683 = vsel %vm517, %v1675, 0.0
    %1684 = vadd.xlane.f32.xlu0 %v1683
    %v1685 = vpop.xlane.xlu0 %1684
    %v1686 = vsel %vm517, %v1677, 0.0
    %1687 = vadd.xlane.f32.xlu0 %v1686
    %v1688 = vpop.xlane.xlu0 %1687
    %v1689 = vsel %vm517, %v1679, 0.0
    %1690 = vadd.xlane.f32.xlu0 %v1689
    %v1691 = vpop.xlane.xlu0 %1690
    %v1692 = vrcp.pop %v1682
    %v1693 = vrcp.pop %v1685
    %v1694 = vrcp.pop %v1688
    %v1695 = vrcp.pop %v1691
    %v1696 = vmul.f32 %v1673, %v1692
    %v1697 = vmul.f32 %v1675, %v1693
    %v1698 = vmul.f32 %v1677, %v1694
    %v1699 = vmul.f32 %v1679, %v1695
    %v1702 = vsel %vm517, %v1696, 0
    %v1705 = vsel %vm517, %v1697, 0
    %1707 = vmatprep.subr.mxu0 0.0
    %1708 = vmatpush1.msra.mxu0 0.0
    %1709 = vmatprep.subr.mxu0 0.0
    %1710 = vmatpush1.msra.mxu0 0.0
    %1711 = vmatprep.subr.mxu0 0.0
    %1712 = vmatpush1.msra.mxu0 0.0
    %1713 = vmatprep.subr.mxu0 0.0
    %1714 = vmatpush1.msra.mxu0 0.0
    %1715 = vmatprep.subr.mxu0 0.0
    %1716 = vmatpush1.msra.mxu0 0.0
    %1717 = vmatprep.subr.mxu0 0.0
    %1718 = vmatpush1.msra.mxu0 0.0
    %1719 = vmatprep.subr.mxu0 0.0
    %1720 = vmatpush1.msra.mxu0 0.0
    %1721 = vmatprep.subr.mxu0 0.0
    %1722 = vmatpush1.msra.mxu0 0.0
    %1723 = vmatprep.subr.mxu0 0.0
    %1724 = vmatpush1.msra.mxu0 0.0
    %1725 = vmatprep.subr.mxu0 0.0
    %1726 = vmatpush1.msra.mxu0 0.0
    %1727 = vmatprep.subr.mxu0 0.0
    %1728 = vmatpush1.msra.mxu0 0.0
    %1729 = vmatprep.subr.mxu0 0.0
    %1730 = vmatpush1.msra.mxu0 0.0
    %1731 = vmatprep.subr.mxu0 0.0
    %1732 = vmatpush1.msra.mxu0 0.0
    %1733 = vmatprep.subr.mxu0 0.0
    %1734 = vmatpush1.msra.mxu0 0.0
    %1735 = vmatprep.subr.mxu0 0.0
    %1736 = vmatpush1.msra.mxu0 0.0
    %1737 = vmatprep.subr.mxu0 0.0
    %1738 = vmatpush1.msra.mxu0 %v1483
    %1739 = vmatprep.subr.mxu0 0.0
    %1740 = vmatpush2.msra.mxu0 0.0
    %1741 = vmatprep.subr.mxu0 0.0
    %1742 = vmatpush2.msra.mxu0 0.0
    %1743 = vmatprep.subr.mxu0 0.0
    %1744 = vmatpush2.msra.mxu0 0.0
    %1745 = vmatprep.subr.mxu0 0.0
    %1746 = vmatpush2.msra.mxu0 0.0
    %1747 = vmatprep.subr.mxu0 0.0
    %1748 = vmatpush2.msra.mxu0 0.0
    %1749 = vmatprep.subr.mxu0 0.0
    %1750 = vmatpush2.msra.mxu0 0.0
    %1751 = vmatprep.subr.mxu0 0.0
    %1752 = vmatpush2.msra.mxu0 0.0
    %1753 = vmatprep.subr.mxu0 0.0
    %1754 = vmatpush2.msra.mxu0 0.0
    %1755 = vmatprep.subr.mxu0 0.0
    %1756 = vmatpush2.msra.mxu0 0.0
    %1757 = vmatprep.subr.mxu0 0.0
    %1758 = vmatpush2.msra.mxu0 0.0
    %1759 = vmatprep.subr.mxu0 0.0
    %1760 = vmatpush2.msra.mxu0 0.0
    %1761 = vmatprep.subr.mxu0 0.0
    %1762 = vmatpush2.msra.mxu0 0.0
    %1763 = vmatprep.subr.mxu0 0.0
    %1764 = vmatpush2.msra.mxu0 0.0
    %1765 = vmatprep.subr.mxu0 0.0
    %1766 = vmatpush2.msra.mxu0 0.0
    %1767 = vmatprep.subr.mxu0 0.0
    %1768 = vmatpush2.msra.mxu0 0.0
    %1769 = vmatprep.subr.mxu0 0.0
    %1770 = vmatpush2.msra.mxu0 0.0
    %1771 = vmatprep.mubr.f32.mxu0 0.0
    %1772 = vmatmul.mubr.f32.gmra.mxu0 %v1702
    %v1773 = vpop.f32.mrf.mxu0
    %v1774 = vadd.f32 0.0, %v1773
    %v1775 = vpop.f32.mrf.mxu0
    %1776 = vmatprep.mubr.f32.mxu0 0.0
    %1777 = vmatmul.mubr.f32.gmra.mxu0 %v1705
    %v1778 = vpop.f32.mrf.mxu0
    %v1779 = vadd.f32 0.0, %v1778
    %v1780 = vpop.f32.mrf.mxu0
    %1781 = vdwg.mxu0
    %v1784 = vsel %vm517, %v1698, 0
    %v1787 = vsel %vm517, %v1699, 0
    %1789 = vmatprep.subr.mxu0 0.0
    %1790 = vmatpush1.msra.mxu0 0.0
    %1791 = vmatprep.subr.mxu0 0.0
    %1792 = vmatpush1.msra.mxu0 0.0
    %1793 = vmatprep.subr.mxu0 0.0
    %1794 = vmatpush1.msra.mxu0 0.0
    %1795 = vmatprep.subr.mxu0 0.0
    %1796 = vmatpush1.msra.mxu0 0.0
    %1797 = vmatprep.subr.mxu0 0.0
    %1798 = vmatpush1.msra.mxu0 0.0
    %1799 = vmatprep.subr.mxu0 0.0
    %1800 = vmatpush1.msra.mxu0 0.0
    %1801 = vmatprep.subr.mxu0 0.0
    %1802 = vmatpush1.msra.mxu0 0.0
    %1803 = vmatprep.subr.mxu0 0.0
    %1804 = vmatpush1.msra.mxu0 0.0
    %1805 = vmatprep.subr.mxu0 0.0
    %1806 = vmatpush1.msra.mxu0 0.0
    %1807 = vmatprep.subr.mxu0 0.0
    %1808 = vmatpush1.msra.mxu0 0.0
    %1809 = vmatprep.subr.mxu0 0.0
    %1810 = vmatpush1.msra.mxu0 0.0
    %1811 = vmatprep.subr.mxu0 0.0
    %1812 = vmatpush1.msra.mxu0 0.0
    %1813 = vmatprep.subr.mxu0 0.0
    %1814 = vmatpush1.msra.mxu0 0.0
    %1815 = vmatprep.subr.mxu0 0.0
    %1816 = vmatpush1.msra.mxu0 0.0
    %1817 = vmatprep.subr.mxu0 0.0
    %1818 = vmatpush1.msra.mxu0 0.0
    %1819 = vmatprep.subr.mxu0 0.0
    %1820 = vmatpush1.msra.mxu0 %v1570
    %1821 = vmatprep.subr.mxu0 0.0
    %1822 = vmatpush2.msra.mxu0 0.0
    %1823 = vmatprep.subr.mxu0 0.0
    %1824 = vmatpush2.msra.mxu0 0.0
    %1825 = vmatprep.subr.mxu0 0.0
    %1826 = vmatpush2.msra.mxu0 0.0
    %1827 = vmatprep.subr.mxu0 0.0
    %1828 = vmatpush2.msra.mxu0 0.0
    %1829 = vmatprep.subr.mxu0 0.0
    %1830 = vmatpush2.msra.mxu0 0.0
    %1831 = vmatprep.subr.mxu0 0.0
    %1832 = vmatpush2.msra.mxu0 0.0
    %1833 = vmatprep.subr.mxu0 0.0
    %1834 = vmatpush2.msra.mxu0 0.0
    %1835 = vmatprep.subr.mxu0 0.0
    %1836 = vmatpush2.msra.mxu0 0.0
    %1837 = vmatprep.subr.mxu0 0.0
    %1838 = vmatpush2.msra.mxu0 0.0
    %1839 = vmatprep.subr.mxu0 0.0
    %1840 = vmatpush2.msra.mxu0 0.0
    %1841 = vmatprep.subr.mxu0 0.0
    %1842 = vmatpush2.msra.mxu0 0.0
    %1843 = vmatprep.subr.mxu0 0.0
    %1844 = vmatpush2.msra.mxu0 0.0
    %1845 = vmatprep.subr.mxu0 0.0
    %1846 = vmatpush2.msra.mxu0 0.0
    %1847 = vmatprep.subr.mxu0 0.0
    %1848 = vmatpush2.msra.mxu0 0.0
    %1849 = vmatprep.subr.mxu0 0.0
    %1850 = vmatpush2.msra.mxu0 0.0
    %1851 = vmatprep.subr.mxu0 0.0
    %1852 = vmatpush2.msra.mxu0 0.0
    %1853 = vmatprep.mubr.f32.mxu0 0.0
    %1854 = vmatmul.mubr.f32.gmra.mxu0 %v1784
    %v1855 = vpop.f32.mrf.mxu0
    %v1856 = vadd.f32 0.0, %v1855
    %v1857 = vpop.f32.mrf.mxu0
    %1858 = vmatprep.mubr.f32.mxu0 0.0
    %1859 = vmatmul.mubr.f32.gmra.mxu0 %v1787
    %v1860 = vpop.f32.mrf.mxu0
    %v1861 = vadd.f32 0.0, %v1860
    %v1862 = vpop.f32.mrf.mxu0
    %1863 = vdwg.mxu0
    %v1864 = vld [vmem:[#allocation8 + $0x10] sm:$0xff]
    %v1866 = vsel %vm517, %v1774, 0
    %v1869 = vsel %vm517, %v1779, 0
    %v1872 = vsel %vm517, %v1856, 0
    %v1875 = vsel %vm517, %v1861, 0
    %1877 = vmatprep.subr.mxu0 0.0
    %1878 = vmatpush1.msra.mxu0 0.0
    %1879 = vmatprep.subr.mxu0 0.0
    %1880 = vmatpush1.msra.mxu0 0.0
    %1881 = vmatprep.subr.mxu0 0.0
    %1882 = vmatpush1.msra.mxu0 0.0
    %1883 = vmatprep.subr.mxu0 0.0
    %1884 = vmatpush1.msra.mxu0 0.0
    %1885 = vmatprep.subr.mxu0 0.0
    %1886 = vmatpush1.msra.mxu0 0.0
    %1887 = vmatprep.subr.mxu0 0.0
    %1888 = vmatpush1.msra.mxu0 0.0
    %1889 = vmatprep.subr.mxu0 0.0
    %1890 = vmatpush1.msra.mxu0 0.0
    %1891 = vmatprep.subr.mxu0 0.0
    %1892 = vmatpush1.msra.mxu0 0.0
    %1893 = vmatprep.subr.mxu0 0.0
    %1894 = vmatpush1.msra.mxu0 0.0
    %1895 = vmatprep.subr.mxu0 0.0
    %1896 = vmatpush1.msra.mxu0 0.0
    %1897 = vmatprep.subr.mxu0 0.0
    %1898 = vmatpush1.msra.mxu0 0.0
    %1899 = vmatprep.subr.mxu0 0.0
    %1900 = vmatpush1.msra.mxu0 0.0
    %1901 = vmatprep.subr.mxu0 0.0
    %1902 = vmatpush1.msra.mxu0 0.0
    %1903 = vmatprep.subr.mxu0 0.0
    %1904 = vmatpush1.msra.mxu0 0.0
    %1905 = vmatprep.subr.mxu0 0.0
    %1906 = vmatpush1.msra.mxu0 0.0
    %1907 = vmatprep.subr.mxu0 0.0
    %1908 = vmatpush1.msra.mxu0 %v1864
    %1909 = vmatprep.subr.mxu0 0.0
    %1910 = vmatpush2.msra.mxu0 0.0
    %1911 = vmatprep.subr.mxu0 0.0
    %1912 = vmatpush2.msra.mxu0 0.0
    %1913 = vmatprep.subr.mxu0 0.0
    %1914 = vmatpush2.msra.mxu0 0.0
    %1915 = vmatprep.subr.mxu0 0.0
    %1916 = vmatpush2.msra.mxu0 0.0
    %1917 = vmatprep.subr.mxu0 0.0
    %1918 = vmatpush2.msra.mxu0 0.0
    %1919 = vmatprep.subr.mxu0 0.0
    %1920 = vmatpush2.msra.mxu0 0.0
    %1921 = vmatprep.subr.mxu0 0.0
    %1922 = vmatpush2.msra.mxu0 0.0
    %1923 = vmatprep.subr.mxu0 0.0
    %1924 = vmatpush2.msra.mxu0 0.0
    %1925 = vmatprep.subr.mxu0 0.0
    %1926 = vmatpush2.msra.mxu0 0.0
    %1927 = vmatprep.subr.mxu0 0.0
    %1928 = vmatpush2.msra.mxu0 0.0
    %1929 = vmatprep.subr.mxu0 0.0
    %1930 = vmatpush2.msra.mxu0 0.0
    %1931 = vmatprep.subr.mxu0 0.0
    %1932 = vmatpush2.msra.mxu0 0.0
    %1933 = vmatprep.subr.mxu0 0.0
    %1934 = vmatpush2.msra.mxu0 0.0
    %1935 = vmatprep.subr.mxu0 0.0
    %1936 = vmatpush2.msra.mxu0 0.0
    %1937 = vmatprep.subr.mxu0 0.0
    %1938 = vmatpush2.msra.mxu0 0.0
    %1939 = vmatprep.subr.mxu0 0.0
    %1940 = vmatpush2.msra.mxu0 0.0
    %1941 = vmatprep.mubr.f32.mxu0 0.0
    %1942 = vmatmul.mubr.f32.gmra.mxu0 %v1866
    %v1943 = vpop.f32.mrf.mxu0
    %v1944 = vadd.f32 0.0, %v1943
    %v1945 = vpop.f32.mrf.mxu0
    %1946 = vmatprep.mubr.f32.mxu0 0.0
    %1947 = vmatmul.mubr.f32.gmra.mxu0 %v1869
    %v1948 = vpop.f32.mrf.mxu0
    %v1949 = vadd.f32 0.0, %v1948
    %v1950 = vpop.f32.mrf.mxu0
    %1951 = vmatprep.mubr.f32.mxu0 0.0
    %1952 = vmatmul.mubr.f32.gmra.mxu0 %v1872
    %v1953 = vpop.f32.mrf.mxu0
    %v1954 = vadd.f32 0.0, %v1953
    %v1955 = vpop.f32.mrf.mxu0
    %1956 = vmatprep.mubr.f32.mxu0 0.0
    %1957 = vmatmul.mubr.f32.gmra.mxu0 %v1875
    %v1958 = vpop.f32.mrf.mxu0
    %v1959 = vadd.f32 0.0, %v1958
    %v1960 = vpop.f32.mrf.mxu0
    %1961 = vdwg.mxu0
    %v1962 = vadd.f32 %v1460, %v1944
    %v1963 = vadd.f32 %v1465, %v1949
    %v1964 = vadd.f32 %v1470, %v1954
    %v1965 = vadd.f32 %v1475, %v1959
    %1966 = vrot.lane.b32.xlu0 %v167, 104
    %v1967 = vpop.permute.xlu0 %1966
    %1968 = vrot.lane.b32.xlu0 %v172, 104
    %v1969 = vpop.permute.xlu0 %1968
    %1970 = vrot.lane.b32.xlu0 %v515, 104
    %v1971 = vpop.permute.xlu0 %1970
    %v1972 = vsel %vm517, %v1967, 0
    %v1974 = vsel %vm517, %v1969, 0
    %v1976 = vsel %vm517, %v1971, 0
    %1978 = vmatprep.subr.mxu0 0.0
    %1979 = vmatpush1.xpose.msra.mxu0 0.0
    %1980 = vmatprep.subr.mxu0 0.0
    %1981 = vmatpush1.xpose.msra.mxu0 0.0
    %1982 = vmatprep.subr.mxu0 0.0
    %1983 = vmatpush1.xpose.msra.mxu0 0.0
    %1984 = vmatprep.subr.mxu0 0.0
    %1985 = vmatpush1.xpose.msra.mxu0 0.0
    %1986 = vmatprep.subr.mxu0 0.0
    %1987 = vmatpush1.xpose.msra.mxu0 0.0
    %1988 = vmatprep.subr.mxu0 0.0
    %1989 = vmatpush1.xpose.msra.mxu0 0.0
    %1990 = vmatprep.subr.mxu0 0.0
    %1991 = vmatpush1.xpose.msra.mxu0 0.0
    %1992 = vmatprep.subr.mxu0 0.0
    %1993 = vmatpush1.xpose.msra.mxu0 0.0
    %1994 = vmatprep.subr.mxu0 0.0
    %1995 = vmatpush1.xpose.msra.mxu0 0.0
    %1996 = vmatprep.subr.mxu0 0.0
    %1997 = vmatpush1.xpose.msra.mxu0 0.0
    %1998 = vmatprep.subr.mxu0 0.0
    %1999 = vmatpush1.xpose.msra.mxu0 0.0
    %2000 = vmatprep.subr.mxu0 0.0
    %2001 = vmatpush1.xpose.msra.mxu0 0.0
    %2002 = vmatprep.subr.mxu0 0.0
    %2003 = vmatpush1.xpose.msra.mxu0 0.0
    %2004 = vmatprep.subr.mxu0 0.0
    %2005 = vmatpush1.xpose.msra.mxu0 0.0
    %2006 = vmatprep.subr.mxu0 0.0
    %2007 = vmatpush1.xpose.msra.mxu0 0.0
    %2008 = vmatprep.subr.mxu0 0.0
    %2009 = vmatpush1.xpose.msra.mxu0 %v1976
    %2010 = vmatprep.subr.mxu0 0.0
    %2011 = vmatpush2.xpose.msra.mxu0 0.0
    %2012 = vmatprep.subr.mxu0 0.0
    %2013 = vmatpush2.xpose.msra.mxu0 0.0
    %2014 = vmatprep.subr.mxu0 0.0
    %2015 = vmatpush2.xpose.msra.mxu0 0.0
    %2016 = vmatprep.subr.mxu0 0.0
    %2017 = vmatpush2.xpose.msra.mxu0 0.0
    %2018 = vmatprep.subr.mxu0 0.0
    %2019 = vmatpush2.xpose.msra.mxu0 0.0
    %2020 = vmatprep.subr.mxu0 0.0
    %2021 = vmatpush2.xpose.msra.mxu0 0.0
    %2022 = vmatprep.subr.mxu0 0.0
    %2023 = vmatpush2.xpose.msra.mxu0 0.0
    %2024 = vmatprep.subr.mxu0 0.0
    %2025 = vmatpush2.xpose.msra.mxu0 0.0
    %2026 = vmatprep.subr.mxu0 0.0
    %2027 = vmatpush2.xpose.msra.mxu0 0.0
    %2028 = vmatprep.subr.mxu0 0.0
    %2029 = vmatpush2.xpose.msra.mxu0 0.0
    %2030 = vmatprep.subr.mxu0 0.0
    %2031 = vmatpush2.xpose.msra.mxu0 0.0
    %2032 = vmatprep.subr.mxu0 0.0
    %2033 = vmatpush2.xpose.msra.mxu0 0.0
    %2034 = vmatprep.subr.mxu0 0.0
    %2035 = vmatpush2.xpose.msra.mxu0 0.0
    %2036 = vmatprep.subr.mxu0 0.0
    %2037 = vmatpush2.xpose.msra.mxu0 0.0
    %2038 = vmatprep.subr.mxu0 0.0
    %2039 = vmatpush2.xpose.msra.mxu0 0.0
    %2040 = vmatprep.subr.mxu0 0.0
    %2041 = vmatpush2.xpose.msra.mxu0 0.0
    %2042 = vmatprep.mubr.f32.mxu0 0.0
    %2043 = vmatmul.mubr.f32.gmra.mxu0 %v1972
    %v2044 = vpop.f32.mrf.mxu0
    %v2045 = vadd.f32 0.0, %v2044
    %v2046 = vpop.f32.mrf.mxu0
    %2047 = vmatprep.mubr.f32.mxu0 0.0
    %2048 = vmatmul.mubr.f32.gmra.mxu0 %v1974
    %v2049 = vpop.f32.mrf.mxu0
    %v2050 = vadd.f32 0.0, %v2049
    %v2051 = vpop.f32.mrf.mxu0
    %2052 = vdwg.mxu0
    %2053 = vrot.lane.b32.xlu0 %v177, 104
    %v2054 = vpop.permute.xlu0 %2053
    %2055 = vrot.lane.b32.xlu0 %v182, 104
    %v2056 = vpop.permute.xlu0 %2055
    %2057 = vrot.lane.b32.xlu0 %v516, 104
    %v2058 = vpop.permute.xlu0 %2057
    %v2059 = vsel %vm517, %v2054, 0
    %v2061 = vsel %vm517, %v2056, 0
    %v2063 = vsel %vm517, %v2058, 0
    %2065 = vmatprep.subr.mxu0 0.0
    %2066 = vmatpush1.xpose.msra.mxu0 0.0
    %2067 = vmatprep.subr.mxu0 0.0
    %2068 = vmatpush1.xpose.msra.mxu0 0.0
    %2069 = vmatprep.subr.mxu0 0.0
    %2070 = vmatpush1.xpose.msra.mxu0 0.0
    %2071 = vmatprep.subr.mxu0 0.0
    %2072 = vmatpush1.xpose.msra.mxu0 0.0
    %2073 = vmatprep.subr.mxu0 0.0
    %2074 = vmatpush1.xpose.msra.mxu0 0.0
    %2075 = vmatprep.subr.mxu0 0.0
    %2076 = vmatpush1.xpose.msra.mxu0 0.0
    %2077 = vmatprep.subr.mxu0 0.0
    %2078 = vmatpush1.xpose.msra.mxu0 0.0
    %2079 = vmatprep.subr.mxu0 0.0
    %2080 = vmatpush1.xpose.msra.mxu0 0.0
    %2081 = vmatprep.subr.mxu0 0.0
    %2082 = vmatpush1.xpose.msra.mxu0 0.0
    %2083 = vmatprep.subr.mxu0 0.0
    %2084 = vmatpush1.xpose.msra.mxu0 0.0
    %2085 = vmatprep.subr.mxu0 0.0
    %2086 = vmatpush1.xpose.msra.mxu0 0.0
    %2087 = vmatprep.subr.mxu0 0.0
    %2088 = vmatpush1.xpose.msra.mxu0 0.0
    %2089 = vmatprep.subr.mxu0 0.0
    %2090 = vmatpush1.xpose.msra.mxu0 0.0
    %2091 = vmatprep.subr.mxu0 0.0
    %2092 = vmatpush1.xpose.msra.mxu0 0.0
    %2093 = vmatprep.subr.mxu0 0.0
    %2094 = vmatpush1.xpose.msra.mxu0 0.0
    %2095 = vmatprep.subr.mxu0 0.0
    %2096 = vmatpush1.xpose.msra.mxu0 %v2063
    %2097 = vmatprep.subr.mxu0 0.0
    %2098 = vmatpush2.xpose.msra.mxu0 0.0
    %2099 = vmatprep.subr.mxu0 0.0
    %2100 = vmatpush2.xpose.msra.mxu0 0.0
    %2101 = vmatprep.subr.mxu0 0.0
    %2102 = vmatpush2.xpose.msra.mxu0 0.0
    %2103 = vmatprep.subr.mxu0 0.0
    %2104 = vmatpush2.xpose.msra.mxu0 0.0
    %2105 = vmatprep.subr.mxu0 0.0
    %2106 = vmatpush2.xpose.msra.mxu0 0.0
    %2107 = vmatprep.subr.mxu0 0.0
    %2108 = vmatpush2.xpose.msra.mxu0 0.0
    %2109 = vmatprep.subr.mxu0 0.0
    %2110 = vmatpush2.xpose.msra.mxu0 0.0
    %2111 = vmatprep.subr.mxu0 0.0
    %2112 = vmatpush2.xpose.msra.mxu0 0.0
    %2113 = vmatprep.subr.mxu0 0.0
    %2114 = vmatpush2.xpose.msra.mxu0 0.0
    %2115 = vmatprep.subr.mxu0 0.0
    %2116 = vmatpush2.xpose.msra.mxu0 0.0
    %2117 = vmatprep.subr.mxu0 0.0
    %2118 = vmatpush2.xpose.msra.mxu0 0.0
    %2119 = vmatprep.subr.mxu0 0.0
    %2120 = vmatpush2.xpose.msra.mxu0 0.0
    %2121 = vmatprep.subr.mxu0 0.0
    %2122 = vmatpush2.xpose.msra.mxu0 0.0
    %2123 = vmatprep.subr.mxu0 0.0
    %2124 = vmatpush2.xpose.msra.mxu0 0.0
    %2125 = vmatprep.subr.mxu0 0.0
    %2126 = vmatpush2.xpose.msra.mxu0 0.0
    %2127 = vmatprep.subr.mxu0 0.0
    %2128 = vmatpush2.xpose.msra.mxu0 0.0
    %2129 = vmatprep.mubr.f32.mxu0 0.0
    %2130 = vmatmul.mubr.f32.gmra.mxu0 %v2059
    %v2131 = vpop.f32.mrf.mxu0
    %v2132 = vadd.f32 0.0, %v2131
    %v2133 = vpop.f32.mrf.mxu0
    %2134 = vmatprep.mubr.f32.mxu0 0.0
    %2135 = vmatmul.mubr.f32.gmra.mxu0 %v2061
    %v2136 = vpop.f32.mrf.mxu0
    %v2137 = vadd.f32 0.0, %v2136
    %v2138 = vpop.f32.mrf.mxu0
    %2139 = vdwg.mxu0
    %v2140 = vmul.f32 %v2045, 0.35355338
    %v2141 = vmul.f32 %v2050, 0.35355338
    %v2142 = vmul.f32 %v2132, 0.35355338
    %v2143 = vmul.f32 %v2137, 0.35355338
    %v2144 = vsel %vm517, %v2140, -inf
    %2145 = vmax.xlane.f32.xlu0 %v2144
    %v2146 = vpop.xlane.xlu0 %2145
    %v2147 = vsel %vm517, %v2141, -inf
    %2148 = vmax.xlane.f32.xlu0 %v2147
    %v2149 = vpop.xlane.xlu0 %2148
    %v2150 = vsel %vm517, %v2142, -inf
    %2151 = vmax.xlane.f32.xlu0 %v2150
    %v2152 = vpop.xlane.xlu0 %2151
    %v2153 = vsel %vm517, %v2143, -inf
    %2154 = vmax.xlane.f32.xlu0 %v2153
    %v2155 = vpop.xlane.xlu0 %2154
    %v2156 = vsub.f32 %v2140, %v2146
    %v2157 = vsub.f32 %v2141, %v2149
    %v2158 = vsub.f32 %v2142, %v2152
    %v2159 = vsub.f32 %v2143, %v2155
    %v2160 = vmul.f32 %v2156, 1.442695
    %v2161 = vpow.pop %v2160
    %v2162 = vmul.f32 %v2157, 1.442695
    %v2163 = vpow.pop %v2162
    %v2164 = vmul.f32 %v2158, 1.442695
    %v2165 = vpow.pop %v2164
    %v2166 = vmul.f32 %v2159, 1.442695
    %v2167 = vpow.pop %v2166
    %v2168 = vsel %vm517, %v2161, 0.0
    %2169 = vadd.xlane.f32.xlu0 %v2168
    %v2170 = vpop.xlane.xlu0 %2169
    %v2171 = vsel %vm517, %v2163, 0.0
    %2172 = vadd.xlane.f32.xlu0 %v2171
    %v2173 = vpop.xlane.xlu0 %2172
    %v2174 = vsel %vm517, %v2165, 0.0
    %2175 = vadd.xlane.f32.xlu0 %v2174
    %v2176 = vpop.xlane.xlu0 %2175
    %v2177 = vsel %vm517, %v2167, 0.0
    %2178 = vadd.xlane.f32.xlu0 %v2177
    %v2179 = vpop.xlane.xlu0 %2178
    %v2180 = vrcp.pop %v2170
    %v2181 = vrcp.pop %v2173
    %v2182 = vrcp.pop %v2176
    %v2183 = vrcp.pop %v2179
    %v2184 = vmul.f32 %v2161, %v2180
    %v2185 = vmul.f32 %v2163, %v2181
    %v2186 = vmul.f32 %v2165, %v2182
    %v2187 = vmul.f32 %v2167, %v2183
    %v2190 = vsel %vm517, %v2184, 0
    %v2193 = vsel %vm517, %v2185, 0
    %2195 = vmatprep.subr.mxu0 0.0
    %2196 = vmatpush1.msra.mxu0 0.0
    %2197 = vmatprep.subr.mxu0 0.0
    %2198 = vmatpush1.msra.mxu0 0.0
    %2199 = vmatprep.subr.mxu0 0.0
    %2200 = vmatpush1.msra.mxu0 0.0
    %2201 = vmatprep.subr.mxu0 0.0
    %2202 = vmatpush1.msra.mxu0 0.0
    %2203 = vmatprep.subr.mxu0 0.0
    %2204 = vmatpush1.msra.mxu0 0.0
    %2205 = vmatprep.subr.mxu0 0.0
    %2206 = vmatpush1.msra.mxu0 0.0
    %2207 = vmatprep.subr.mxu0 0.0
    %2208 = vmatpush1.msra.mxu0 0.0
    %2209 = vmatprep.subr.mxu0 0.0
    %2210 = vmatpush1.msra.mxu0 0.0
    %2211 = vmatprep.subr.mxu0 0.0
    %2212 = vmatpush1.msra.mxu0 0.0
    %2213 = vmatprep.subr.mxu0 0.0
    %2214 = vmatpush1.msra.mxu0 0.0
    %2215 = vmatprep.subr.mxu0 0.0
    %2216 = vmatpush1.msra.mxu0 0.0
    %2217 = vmatprep.subr.mxu0 0.0
    %2218 = vmatpush1.msra.mxu0 0.0
    %2219 = vmatprep.subr.mxu0 0.0
    %2220 = vmatpush1.msra.mxu0 0.0
    %2221 = vmatprep.subr.mxu0 0.0
    %2222 = vmatpush1.msra.mxu0 0.0
    %2223 = vmatprep.subr.mxu0 0.0
    %2224 = vmatpush1.msra.mxu0 0.0
    %2225 = vmatprep.subr.mxu0 0.0
    %2226 = vmatpush1.msra.mxu0 %v1971
    %2227 = vmatprep.subr.mxu0 0.0
    %2228 = vmatpush2.msra.mxu0 0.0
    %2229 = vmatprep.subr.mxu0 0.0
    %2230 = vmatpush2.msra.mxu0 0.0
    %2231 = vmatprep.subr.mxu0 0.0
    %2232 = vmatpush2.msra.mxu0 0.0
    %2233 = vmatprep.subr.mxu0 0.0
    %2234 = vmatpush2.msra.mxu0 0.0
    %2235 = vmatprep.subr.mxu0 0.0
    %2236 = vmatpush2.msra.mxu0 0.0
    %2237 = vmatprep.subr.mxu0 0.0
    %2238 = vmatpush2.msra.mxu0 0.0
    %2239 = vmatprep.subr.mxu0 0.0
    %2240 = vmatpush2.msra.mxu0 0.0
    %2241 = vmatprep.subr.mxu0 0.0
    %2242 = vmatpush2.msra.mxu0 0.0
    %2243 = vmatprep.subr.mxu0 0.0
    %2244 = vmatpush2.msra.mxu0 0.0
    %2245 = vmatprep.subr.mxu0 0.0
    %2246 = vmatpush2.msra.mxu0 0.0
    %2247 = vmatprep.subr.mxu0 0.0
    %2248 = vmatpush2.msra.mxu0 0.0
    %2249 = vmatprep.subr.mxu0 0.0
    %2250 = vmatpush2.msra.mxu0 0.0
    %2251 = vmatprep.subr.mxu0 0.0
    %2252 = vmatpush2.msra.mxu0 0.0
    %2253 = vmatprep.subr.mxu0 0.0
    %2254 = vmatpush2.msra.mxu0 0.0
    %2255 = vmatprep.subr.mxu0 0.0
    %2256 = vmatpush2.msra.mxu0 0.0
    %2257 = vmatprep.subr.mxu0 0.0
    %2258 = vmatpush2.msra.mxu0 0.0
    %2259 = vmatprep.mubr.f32.mxu0 0.0
    %2260 = vmatmul.mubr.f32.gmra.mxu0 %v2190
    %v2261 = vpop.f32.mrf.mxu0
    %v2262 = vadd.f32 0.0, %v2261
    %v2263 = vpop.f32.mrf.mxu0
    %2264 = vmatprep.mubr.f32.mxu0 0.0
    %2265 = vmatmul.mubr.f32.gmra.mxu0 %v2193
    %v2266 = vpop.f32.mrf.mxu0
    %v2267 = vadd.f32 0.0, %v2266
    %v2268 = vpop.f32.mrf.mxu0
    %2269 = vdwg.mxu0
    %v2272 = vsel %vm517, %v2186, 0
    %v2275 = vsel %vm517, %v2187, 0
    %2277 = vmatprep.subr.mxu0 0.0
    %2278 = vmatpush1.msra.mxu0 0.0
    %2279 = vmatprep.subr.mxu0 0.0
    %2280 = vmatpush1.msra.mxu0 0.0
    %2281 = vmatprep.subr.mxu0 0.0
    %2282 = vmatpush1.msra.mxu0 0.0
    %2283 = vmatprep.subr.mxu0 0.0
    %2284 = vmatpush1.msra.mxu0 0.0
    %2285 = vmatprep.subr.mxu0 0.0
    %2286 = vmatpush1.msra.mxu0 0.0
    %2287 = vmatprep.subr.mxu0 0.0
    %2288 = vmatpush1.msra.mxu0 0.0
    %2289 = vmatprep.subr.mxu0 0.0
    %2290 = vmatpush1.msra.mxu0 0.0
    %2291 = vmatprep.subr.mxu0 0.0
    %2292 = vmatpush1.msra.mxu0 0.0
    %2293 = vmatprep.subr.mxu0 0.0
    %2294 = vmatpush1.msra.mxu0 0.0
    %2295 = vmatprep.subr.mxu0 0.0
    %2296 = vmatpush1.msra.mxu0 0.0
    %2297 = vmatprep.subr.mxu0 0.0
    %2298 = vmatpush1.msra.mxu0 0.0
    %2299 = vmatprep.subr.mxu0 0.0
    %2300 = vmatpush1.msra.mxu0 0.0
    %2301 = vmatprep.subr.mxu0 0.0
    %2302 = vmatpush1.msra.mxu0 0.0
    %2303 = vmatprep.subr.mxu0 0.0
    %2304 = vmatpush1.msra.mxu0 0.0
    %2305 = vmatprep.subr.mxu0 0.0
    %2306 = vmatpush1.msra.mxu0 0.0
    %2307 = vmatprep.subr.mxu0 0.0
    %2308 = vmatpush1.msra.mxu0 %v2058
    %2309 = vmatprep.subr.mxu0 0.0
    %2310 = vmatpush2.msra.mxu0 0.0
    %2311 = vmatprep.subr.mxu0 0.0
    %2312 = vmatpush2.msra.mxu0 0.0
    %2313 = vmatprep.subr.mxu0 0.0
    %2314 = vmatpush2.msra.mxu0 0.0
    %2315 = vmatprep.subr.mxu0 0.0
    %2316 = vmatpush2.msra.mxu0 0.0
    %2317 = vmatprep.subr.mxu0 0.0
    %2318 = vmatpush2.msra.mxu0 0.0
    %2319 = vmatprep.subr.mxu0 0.0
    %2320 = vmatpush2.msra.mxu0 0.0
    %2321 = vmatprep.subr.mxu0 0.0
    %2322 = vmatpush2.msra.mxu0 0.0
    %2323 = vmatprep.subr.mxu0 0.0
    %2324 = vmatpush2.msra.mxu0 0.0
    %2325 = vmatprep.subr.mxu0 0.0
    %2326 = vmatpush2.msra.mxu0 0.0
    %2327 = vmatprep.subr.mxu0 0.0
    %2328 = vmatpush2.msra.mxu0 0.0
    %2329 = vmatprep.subr.mxu0 0.0
    %2330 = vmatpush2.msra.mxu0 0.0
    %2331 = vmatprep.subr.mxu0 0.0
    %2332 = vmatpush2.msra.mxu0 0.0
    %2333 = vmatprep.subr.mxu0 0.0
    %2334 = vmatpush2.msra.mxu0 0.0
    %2335 = vmatprep.subr.mxu0 0.0
    %2336 = vmatpush2.msra.mxu0 0.0
    %2337 = vmatprep.subr.mxu0 0.0
    %2338 = vmatpush2.msra.mxu0 0.0
    %2339 = vmatprep.subr.mxu0 0.0
    %2340 = vmatpush2.msra.mxu0 0.0
    %2341 = vmatprep.mubr.f32.mxu0 0.0
    %2342 = vmatmul.mubr.f32.gmra.mxu0 %v2272
    %v2343 = vpop.f32.mrf.mxu0
    %v2344 = vadd.f32 0.0, %v2343
    %v2345 = vpop.f32.mrf.mxu0
    %2346 = vmatprep.mubr.f32.mxu0 0.0
    %2347 = vmatmul.mubr.f32.gmra.mxu0 %v2275
    %v2348 = vpop.f32.mrf.mxu0
    %v2349 = vadd.f32 0.0, %v2348
    %v2350 = vpop.f32.mrf.mxu0
    %2351 = vdwg.mxu0
    %v2352 = vld [vmem:[#allocation8 + $0x18] sm:$0xff]
    %v2354 = vsel %vm517, %v2262, 0
    %v2357 = vsel %vm517, %v2267, 0
    %v2360 = vsel %vm517, %v2344, 0
    %v2363 = vsel %vm517, %v2349, 0
    %2365 = vmatprep.subr.mxu0 0.0
    %2366 = vmatpush1.msra.mxu0 0.0
    %2367 = vmatprep.subr.mxu0 0.0
    %2368 = vmatpush1.msra.mxu0 0.0
    %2369 = vmatprep.subr.mxu0 0.0
    %2370 = vmatpush1.msra.mxu0 0.0
    %2371 = vmatprep.subr.mxu0 0.0
    %2372 = vmatpush1.msra.mxu0 0.0
    %2373 = vmatprep.subr.mxu0 0.0
    %2374 = vmatpush1.msra.mxu0 0.0
    %2375 = vmatprep.subr.mxu0 0.0
    %2376 = vmatpush1.msra.mxu0 0.0
    %2377 = vmatprep.subr.mxu0 0.0
    %2378 = vmatpush1.msra.mxu0 0.0
    %2379 = vmatprep.subr.mxu0 0.0
    %2380 = vmatpush1.msra.mxu0 0.0
    %2381 = vmatprep.subr.mxu0 0.0
    %2382 = vmatpush1.msra.mxu0 0.0
    %2383 = vmatprep.subr.mxu0 0.0
    %2384 = vmatpush1.msra.mxu0 0.0
    %2385 = vmatprep.subr.mxu0 0.0
    %2386 = vmatpush1.msra.mxu0 0.0
    %2387 = vmatprep.subr.mxu0 0.0
    %2388 = vmatpush1.msra.mxu0 0.0
    %2389 = vmatprep.subr.mxu0 0.0
    %2390 = vmatpush1.msra.mxu0 0.0
    %2391 = vmatprep.subr.mxu0 0.0
    %2392 = vmatpush1.msra.mxu0 0.0
    %2393 = vmatprep.subr.mxu0 0.0
    %2394 = vmatpush1.msra.mxu0 0.0
    %2395 = vmatprep.subr.mxu0 0.0
    %2396 = vmatpush1.msra.mxu0 %v2352
    %2397 = vmatprep.subr.mxu0 0.0
    %2398 = vmatpush2.msra.mxu0 0.0
    %2399 = vmatprep.subr.mxu0 0.0
    %2400 = vmatpush2.msra.mxu0 0.0
    %2401 = vmatprep.subr.mxu0 0.0
    %2402 = vmatpush2.msra.mxu0 0.0
    %2403 = vmatprep.subr.mxu0 0.0
    %2404 = vmatpush2.msra.mxu0 0.0
    %2405 = vmatprep.subr.mxu0 0.0
    %2406 = vmatpush2.msra.mxu0 0.0
    %2407 = vmatprep.subr.mxu0 0.0
    %2408 = vmatpush2.msra.mxu0 0.0
    %2409 = vmatprep.subr.mxu0 0.0
    %2410 = vmatpush2.msra.mxu0 0.0
    %2411 = vmatprep.subr.mxu0 0.0
    %2412 = vmatpush2.msra.mxu0 0.0
    %2413 = vmatprep.subr.mxu0 0.0
    %2414 = vmatpush2.msra.mxu0 0.0
    %2415 = vmatprep.subr.mxu0 0.0
    %2416 = vmatpush2.msra.mxu0 0.0
    %2417 = vmatprep.subr.mxu0 0.0
    %2418 = vmatpush2.msra.mxu0 0.0
    %2419 = vmatprep.subr.mxu0 0.0
    %2420 = vmatpush2.msra.mxu0 0.0
    %2421 = vmatprep.subr.mxu0 0.0
    %2422 = vmatpush2.msra.mxu0 0.0
    %2423 = vmatprep.subr.mxu0 0.0
    %2424 = vmatpush2.msra.mxu0 0.0
    %2425 = vmatprep.subr.mxu0 0.0
    %2426 = vmatpush2.msra.mxu0 0.0
    %2427 = vmatprep.subr.mxu0 0.0
    %2428 = vmatpush2.msra.mxu0 0.0
    %2429 = vmatprep.mubr.f32.mxu0 0.0
    %2430 = vmatmul.mubr.f32.gmra.mxu0 %v2354
    %v2431 = vpop.f32.mrf.mxu0
    %v2432 = vadd.f32 0.0, %v2431
    %v2433 = vpop.f32.mrf.mxu0
    %2434 = vmatprep.mubr.f32.mxu0 0.0
    %2435 = vmatmul.mubr.f32.gmra.mxu0 %v2357
    %v2436 = vpop.f32.mrf.mxu0
    %v2437 = vadd.f32 0.0, %v2436
    %v2438 = vpop.f32.mrf.mxu0
    %2439 = vmatprep.mubr.f32.mxu0 0.0
    %2440 = vmatmul.mubr.f32.gmra.mxu0 %v2360
    %v2441 = vpop.f32.mrf.mxu0
    %v2442 = vadd.f32 0.0, %v2441
    %v2443 = vpop.f32.mrf.mxu0
    %2444 = vmatprep.mubr.f32.mxu0 0.0
    %2445 = vmatmul.mubr.f32.gmra.mxu0 %v2363
    %v2446 = vpop.f32.mrf.mxu0
    %v2447 = vadd.f32 0.0, %v2446
    %v2448 = vpop.f32.mrf.mxu0
    %2449 = vdwg.mxu0
    %v2450 = vadd.f32 %v1962, %v2432
    %v2451 = vadd.f32 %v1963, %v2437
    %v2452 = vadd.f32 %v1964, %v2442
    %v2453 = vadd.f32 %v1965, %v2447
    %v2454 = vld [vmem:[%s5] sm:$0x1]
    %v2456 = vlaneseq
    %v2457 = vshrl.u32 %v2456, 7
    %v2458 = vsub.s32 0, %v2457
    %v2459 = vrot.slane %v2454, %v2458
    %v2461 = vadd.f32 %v2450, %v2459
    %v2462 = vadd.f32 %v2451, %v2459
    %v2463 = vadd.f32 %v2452, %v2459
    %v2464 = vadd.f32 %v2453, %v2459
    %2465 = vst.msk [vmem:[#allocation10] sm:$0xff] %vm87, %v2461
    %2466 = vst.msk [vmem:[#allocation10 + $0x8] sm:$0xff] %vm87, %v2462
    %2467 = vst.msk [vmem:[#allocation10 + $0x10] sm:$0xff] %vm87, %v2463
    %2468 = vst.msk [vmem:[#allocation10 + $0x18] sm:$0xff] %vm87, %v2464
    // Predicated region
    $region42: #{tpu_custom_call.1} parent=1 // pred_check
      _
    $region43: #{tpu_custom_call.1} parent=1 // pred_check_branch
      %2470 = sbr.rel (0) target = $region45
    $region44: #{tpu_custom_call.1} parent=1 // pred_region
      %s2472 = ssub.s32 512, 512
      %2473 = vsyncadd [#allocation4], %s2472
      %s2474 = sshll.u32 [#allocation10], 4
      %s2475 = int_to_ptr.vmem [resolvable:$true] %s2474
      %2480 = dma.vmem_to_hbm [thread:$0]  %s2475, 512, %s6, [#allocation4], 128, 128, 8
    $region45: #{tpu_custom_call.1} parent=1 // pred_fallthru
      _
    // Predicated region
    $region46: #{tpu_custom_call.1} parent=1 // pred_check
      _
    $region47: #{tpu_custom_call.1} parent=1 // pred_check_branch
      %2482 = sbr.rel (0) target = $region49
    $region48: #{tpu_custom_call.1} parent=1 // pred_region
      %2483 = dma.done [#allocation4], 512
    $region49: #{tpu_custom_call.1} parent=1 // pred_fallthru
      _
    %2484 = vsyncpa [#allocation3], 1
    %2485 = vsyncpa [#allocation6], 1
    %2486 = vsyncpa [#allocation9], 1
    %2487 = vsyncpa [#allocation4], 1

</llo_original>
